<compile_context>
chip_gen: v7x
topology: tpu7x:2x2x1
jax: 0.10.0
libtpu: 0.0.40
codegen_flags: <defaults>
</compile_context>

<pallas_src>
import functools

import jax
import jax.numpy as jnp
from jax.experimental import pallas as pl
from jax.experimental.pallas import tpu as pltpu


def encoder_layer_kernel(x_ref, bias_ref,
                         wq_ref, wk_ref, wv_ref, wo_ref,
                         bq_ref, bk_ref, bv_ref, bo_ref,
                         g1_ref, be1_ref,
                         w1_ref, b1_ref, w2_ref, b2_ref,
                         g2_ref, be2_ref,
                         o_ref,
                         ctx_ref,          # VMEM scratch (block_b*T, D) bf16
                         *, num_heads, key_tile):
    Bb, T, D = x_ref.shape                     # block: block_b batch elements
    H = num_heads
    dk = D // H
    M = Bb * T
    n_kt = T // key_tile                       # static number of key tiles

    # ---- collapse batch rows into M once; cast activations to bf16 once ----------
    x2 = x_ref[...].astype(jnp.float32).reshape(M, D)      # (M, D) f32 residual path
    x_bf = x2.astype(jnp.bfloat16)

    # ---- QKV projections: big-M bf16 matmuls, f32 accumulation --------------------
    scale = jnp.float32(1.0 / (dk ** 0.5))
    # 1/sqrt(dk) folded into q on the (M, D) slab (cheaper than scaling (H,T,T) scores).
    q = (jnp.dot(x_bf, wq_ref[...], preferred_element_type=jnp.float32)
         + bq_ref[...]) * scale
    k = jnp.dot(x_bf, wk_ref[...], preferred_element_type=jnp.float32) + bk_ref[...]
    v = jnp.dot(x_bf, wv_ref[...], preferred_element_type=jnp.float32) + bv_ref[...]

    bias = bias_ref[...]                       # (Bb, 1, T) f32 additive (0 / -1e30)

    # ---- attention: heads batched in rank-3 einsums, flash over key tiles ---------
    for e in range(Bb):                        # static unroll; ctx stored to scratch
        r0 = e * T
        qe = q[r0:r0 + T, :].astype(jnp.bfloat16)           # (T, D)
        ke = k[r0:r0 + T, :].astype(jnp.bfloat16)
        ve = v[r0:r0 + T, :].astype(jnp.bfloat16)

        # Single (T, D)->(D, T) transpose per tensor, then a leading (tile-aligned
        # when dk % 8 == 0) split to (H, dk, T). No extra swapaxes passes.
        q_ht = qe.T.reshape(H, dk, T)                        # (H, dk, T)
        k_ht = ke.T.reshape(H, dk, T)
        v_ht = ve.T.reshape(H, dk, T)
        b_e = bias[e]                                        # (1, T)

        m_i = None
        l_i = None
        acc = None
        for t in range(n_kt):                 # online softmax over key tiles (flash)
            c0 = t * key_tile
            k_t = k_ht[:, :, c0:c0 + key_tile]
            v_t = v_ht[:, :, c0:c0 + key_tile]
            s = jnp.einsum("hcq,hck->hqk", q_ht, k_t,
                           preferred_element_type=jnp.float32)   # (H, T, kt)
            s = s + b_e[None, :, c0:c0 + key_tile]
            m_t = jnp.max(s, axis=-1, keepdims=True)             # (H, T, 1)
            if t == 0:
                m_i = m_t
                p = jnp.exp(s - m_i)
                l_i = jnp.sum(p, axis=-1, keepdims=True)
                acc = jnp.einsum("hck,hqk->hcq", v_t, p.astype(jnp.bfloat16),
                                 preferred_element_type=jnp.float32)  # (H, dk, T)
            else:
                m_new = jnp.maximum(m_i, m_t)
                alpha = jnp.exp(m_i - m_new)                     # (H, T, 1)
                p = jnp.exp(s - m_new)
                l_i = alpha * l_i + jnp.sum(p, axis=-1, keepdims=True)
                acc = (acc * alpha.swapaxes(-1, -2)
                       + jnp.einsum("hck,hqk->hcq", v_t, p.astype(jnp.bfloat16),
                                    preferred_element_type=jnp.float32))
                m_i = m_new
        # TODO(synk): attention dropout omitted (identity at inference).

        inv_l = pl.reciprocal(l_i, approx=True)                  # EUP (free slot)
        ctx_t = acc * inv_l.swapaxes(-1, -2)                     # (H, dk, T)
        # (H, dk, T) -> (D, T) -> (T, D): heads re-merged by a cheap leading merge
        # + one 2-D transpose; stored straight into the VMEM scratch (no concat).
        ctx_ref[pl.ds(r0, T), :] = ctx_t.reshape(D, T).T.astype(ctx_ref.dtype)

    attn = jnp.dot(ctx_ref[...], wo_ref[...],
                   preferred_element_type=jnp.float32) + bo_ref[...]

    # ---- residual + LayerNorm 1 (f32 elementwise) ----------------------------------
    h1 = x2 + attn
    mu = jnp.mean(h1, axis=-1, keepdims=True)
    var = jnp.mean(jnp.square(h1 - mu), axis=-1, keepdims=True)
    h1 = (h1 - mu) * jax.lax.rsqrt(var + 1e-5) * g1_ref[...] + be1_ref[...]

    # ---- feed-forward (bf16 MXU matmuls, f32 accumulation + ReLU) -------------------
    f = jnp.dot(h1.astype(jnp.bfloat16), w1_ref[...],
                preferred_element_type=jnp.float32) + b1_ref[...]
    f = jnp.maximum(f, 0.0)
    f = jnp.dot(f.astype(jnp.bfloat16), w2_ref[...],
                preferred_element_type=jnp.float32) + b2_ref[...]

    # ---- residual + LayerNorm 2 ------------------------------------------------------
    y = h1 + f
    mu2 = jnp.mean(y, axis=-1, keepdims=True)
    var2 = jnp.mean(jnp.square(y - mu2), axis=-1, keepdims=True)
    y = (y - mu2) * jax.lax.rsqrt(var2 + 1e-5) * g2_ref[...] + be2_ref[...]

    o_ref[...] = y.reshape(Bb, T, D).astype(o_ref.dtype)


def prepare_encoder_params(params):
    """One-time cast: weight matrices -> bf16 (MXU-native, half the DMA/VMEM),
    biases + LayerNorm params -> f32. Hoisted out of the per-call path."""
    bf16, f32 = jnp.bfloat16, jnp.float32
    return [
        params["wq"].astype(bf16), params["wk"].astype(bf16),
        params["wv"].astype(bf16), params["wo"].astype(bf16),
        params["bq"].astype(f32), params["bk"].astype(f32),
        params["bv"].astype(f32), params["bo"].astype(f32),
        params["g1"].astype(f32), params["be1"].astype(f32),
        params["w1"].astype(bf16), params["b1"].astype(f32),
        params["w2"].astype(bf16), params["b2"].astype(f32),
        params["g2"].astype(f32), params["be2"].astype(f32),
    ]


def prepare_mask_bias(mask_bool):
    """(B, 1, 1, T) bool (True = keep) -> (B, 1, T) f32 additive bias (0 / -1e30).
    Finite sentinel: no inf-inf NaNs; fully-masked rows become uniform 1/T."""
    B = mask_bool.shape[0]
    T = mask_bool.shape[-1]
    m = mask_bool.reshape(B, 1, T)
    return jnp.where(m, jnp.float32(0.0), jnp.float32(-1e30))


def _vmem_capacity_bytes():
    try:
        return int(pltpu.get_tpu_info().vmem_capacity_bytes)
    except Exception:
        return 64 * 1024 * 1024            # conservative (v7x per-TC)


def _whole_spec(shape):
    """Constant-index (resident) block covering the full array, single-buffered."""
    n = len(shape)
    idx = lambda b, _n=n: (0,) * _n
    if hasattr(pl, "Buffered"):
        try:
            # Weights are fetched once (constant index_map); double-buffering only
            # doubles their resident VMEM footprint -> single-buffer them.
            return pl.BlockSpec(shape, idx, pipeline_mode=pl.Buffered(1))
        except TypeError:
            pass
    return pl.BlockSpec(shape, idx)


def encoder_layer(x, mask_bias, weights, *, num_heads, block_b=None, key_tile=None):
    """x: (B, T, D) f32; mask_bias: (B, 1, T) f32 additive (from prepare_mask_bias);
    weights: list from prepare_encoder_params."""
    B, T, D = x.shape
    assert D % num_heads == 0
    dff = weights[10].shape[1]               # w1 is index 10

    vmem_cap = _vmem_capacity_bytes()
    big_vmem = vmem_cap >= 96 * 1024 * 1024  # v5e / v6e (128 MiB) vs v7x (64 MiB)

    # Batch elements per grid step: bigger M tiles on 128 MiB-VMEM chips, but keep
    # grid >= 2 so v7x's two TensorCores / the pipeline have work to overlap.
    if block_b is None:
        row_target = 512 if big_vmem else 256
        block_b = max(1, min(B, row_target // max(T, 1)))
        if B >= 2:
            block_b = min(block_b, max(1, B // 2))
        while B % block_b:
            block_b -= 1
    assert B % block_b == 0
    grid = (B // block_b,)

    # Key-tile size for the online-softmax attention loop (divides T).
    if key_tile is None:
        key_tile = T
        for cand in (512, 256, 128):
            if T > cand and T % cand == 0:
                key_tile = cand
                break
    assert T % key_tile == 0

    in_specs = [
        pl.BlockSpec((block_b, T, D), lambda b: (b, 0, 0)),   # x
        pl.BlockSpec((block_b, 1, T), lambda b: (b, 0, 0)),   # additive mask bias
    ] + [_whole_spec(w.shape) for w in weights]

    # Advisory cost estimate so XLA schedules around the custom call sensibly.
    flops = 2 * B * T * (4 * D * D + 2 * T * D + 2 * D * dff)
    transcendentals = B * num_heads * T * T + 4 * B * T
    bytes_accessed = (2 * B * T * D * 4 + B * T * 4
                      + sum(int(w.size) * w.dtype.itemsize for w in weights))
    cost = pl.CostEstimate(flops=int(flops),
                           transcendentals=int(transcendentals),
                           bytes_accessed=int(bytes_accessed))

    vmem_limit = int(min(96 * 1024 * 1024, (vmem_cap * 3) // 4))

    return pl.pallas_call(
        functools.partial(encoder_layer_kernel,
                          num_heads=num_heads, key_tile=key_tile),
        out_shape=jax.ShapeDtypeStruct((B, T, D), x.dtype),
        grid=grid,
        in_specs=in_specs,
        out_specs=pl.BlockSpec((block_b, T, D), lambda b: (b, 0, 0)),
        scratch_shapes=[pltpu.VMEM((block_b * T, D), jnp.bfloat16)],  # context slab
        compiler_params=pltpu.CompilerParams(
            dimension_semantics=("parallel",),
            vmem_limit_bytes=vmem_limit),
        cost_estimate=cost,
    )(x, mask_bias, *weights)


def reference_encoder_layer(x, mask_bool, params, *, num_heads):
    """Pure-JAX f32 reference mirroring the PyTorch forward (dropout = identity)."""
    B, T, D = x.shape
    dk = D // num_heads
    q = x @ params["wq"] + params["bq"]
    k = x @ params["wk"] + params["bk"]
    v = x @ params["wv"] + params["bv"]
    q = q.reshape(B, T, num_heads, dk).transpose(0, 2, 1, 3)
    k = k.reshape(B, T, num_heads, dk).transpose(0, 2, 1, 3)
    v = v.reshape(B, T, num_heads, dk).transpose(0, 2, 1, 3)
    s = jnp.einsum("bhtd,bhsd->bhts", q, k) / jnp.sqrt(jnp.float32(dk))
    s = jnp.where(mask_bool, s, -jnp.inf)
    p = jax.nn.softmax(s, axis=-1)
    attn = jnp.einsum("bhts,bhsd->bhtd", p, v).transpose(0, 2, 1, 3).reshape(B, T, D)
    attn = attn @ params["wo"] + params["bo"]

    def ln(z, g, b):
        mu = jnp.mean(z, axis=-1, keepdims=True)
        var = jnp.mean((z - mu) ** 2, axis=-1, keepdims=True)
        return (z - mu) / jnp.sqrt(var + 1e-5) * g + b

    h = ln(x + attn, params["g1"], params["be1"])
    f = jnp.maximum(h @ params["w1"] + params["b1"], 0.0) @ params["w2"] + params["b2"]
    return ln(h + f, params["g2"], params["be2"])


if __name__ == "__main__":
    B, T, D, H, DFF = 2, 8, 32, 4, 64

    key = jax.random.PRNGKey(0)
    keys = jax.random.split(key, 10)

    def w(kk, shape):
        return jax.random.normal(kk, shape, dtype=jnp.float32) * 0.05

    params = {
        "wq": w(keys[0], (D, D)),  "bq": w(keys[1], (1, D)),
        "wk": w(keys[2], (D, D)),  "bk": jnp.zeros((1, D), jnp.float32),
        "wv": w(keys[3], (D, D)),  "bv": jnp.zeros((1, D), jnp.float32),
        "wo": w(keys[4], (D, D)),  "bo": jnp.zeros((1, D), jnp.float32),
        "g1": jnp.ones((1, D), jnp.float32), "be1": jnp.zeros((1, D), jnp.float32),
        "w1": w(keys[5], (D, DFF)), "b1": jnp.zeros((1, DFF), jnp.float32),
        "w2": w(keys[6], (DFF, D)), "b2": jnp.zeros((1, D), jnp.float32),
        "g2": jnp.ones((1, D), jnp.float32), "be2": jnp.zeros((1, D), jnp.float32),
    }

    x = jax.random.normal(keys[7], (B, T, D), dtype=jnp.float32)

    # PyTorch mask is (B, 1, 1, T) boolean; mask one key position in batch element 1.
    mask_bool = jnp.ones((B, 1, 1, T), dtype=bool)
    mask_bool = mask_bool.at[1, 0, 0, T - 1].set(False)

    # One-time (per-inference-session) preparation, hoisted out of the call path.
    weights = prepare_encoder_params(params)
    mask_bias = prepare_mask_bias(mask_bool)

    out = encoder_layer(x, mask_bias, weights, num_heads=H)
    out = jax.block_until_ready(out)

    ref = reference_encoder_layer(x, mask_bool, params, num_heads=H)
    assert out.shape == (B, T, D)
    assert not bool(jnp.any(jnp.isnan(out)))
    max_err = float(jnp.max(jnp.abs(out - ref)))
    # bf16 MXU inputs + approximate softmax reciprocal -> looser tolerance than f32.
    assert jnp.allclose(out, ref, rtol=3e-2, atol=3e-2), (
        f"mismatch vs reference (max abs err {max_err})")

    print("KERNEL_OK")
</pallas_src>

<mosaic_0001>
module attributes {stable_mosaic.version = 11 : i64} {
  func.func @encoder_layer_kernel(%arg0: i32, %arg1: memref<1x8x32xf32, #tpu.memory_space<vmem>>, %arg2: memref<1x1x8xf32, #tpu.memory_space<vmem>>, %arg3: memref<32x32xbf16, #tpu.memory_space<vmem>>, %arg4: memref<32x32xbf16, #tpu.memory_space<vmem>>, %arg5: memref<32x32xbf16, #tpu.memory_space<vmem>>, %arg6: memref<32x32xbf16, #tpu.memory_space<vmem>>, %arg7: memref<1x32xf32, #tpu.memory_space<vmem>>, %arg8: memref<1x32xf32, #tpu.memory_space<vmem>>, %arg9: memref<1x32xf32, #tpu.memory_space<vmem>>, %arg10: memref<1x32xf32, #tpu.memory_space<vmem>>, %arg11: memref<1x32xf32, #tpu.memory_space<vmem>>, %arg12: memref<1x32xf32, #tpu.memory_space<vmem>>, %arg13: memref<32x64xbf16, #tpu.memory_space<vmem>>, %arg14: memref<1x64xf32, #tpu.memory_space<vmem>>, %arg15: memref<64x32xbf16, #tpu.memory_space<vmem>>, %arg16: memref<1x32xf32, #tpu.memory_space<vmem>>, %arg17: memref<1x32xf32, #tpu.memory_space<vmem>>, %arg18: memref<1x32xf32, #tpu.memory_space<vmem>>, %arg19: memref<1x8x32xf32, #tpu.memory_space<vmem>>, %arg20: memref<8x32xbf16, #tpu.memory_space<vmem>>) attributes {dimension_semantics = [#tpu.dimension_semantics<parallel>], iteration_bounds = array<i64: 2>, scalar_prefetch = 0 : i64, scratch_operands = 1 : i64, tpu.core_type = #tpu.core_type<tc>, window_params = [{transform_indices = @transform_0, window_bounds = array<i64: 1, 8, 32>}, {transform_indices = @transform_1, window_bounds = array<i64: 1, 1, 8>}, {pipeline_mode = #tpu.pipeline_mode<synchronous>, transform_indices = @transform_2, window_bounds = array<i64: 32, 32>}, {pipeline_mode = #tpu.pipeline_mode<synchronous>, transform_indices = @transform_3, window_bounds = array<i64: 32, 32>}, {pipeline_mode = #tpu.pipeline_mode<synchronous>, transform_indices = @transform_4, window_bounds = array<i64: 32, 32>}, {pipeline_mode = #tpu.pipeline_mode<synchronous>, transform_indices = @transform_5, window_bounds = array<i64: 32, 32>}, {pipeline_mode = #tpu.pipeline_mode<synchronous>, transform_indices = @transform_6, window_bounds = array<i64: 1, 32>}, {pipeline_mode = #tpu.pipeline_mode<synchronous>, transform_indices = @transform_7, window_bounds = array<i64: 1, 32>}, {pipeline_mode = #tpu.pipeline_mode<synchronous>, transform_indices = @transform_8, window_bounds = array<i64: 1, 32>}, {pipeline_mode = #tpu.pipeline_mode<synchronous>, transform_indices = @transform_9, window_bounds = array<i64: 1, 32>}, {pipeline_mode = #tpu.pipeline_mode<synchronous>, transform_indices = @transform_10, window_bounds = array<i64: 1, 32>}, {pipeline_mode = #tpu.pipeline_mode<synchronous>, transform_indices = @transform_11, window_bounds = array<i64: 1, 32>}, {pipeline_mode = #tpu.pipeline_mode<synchronous>, transform_indices = @transform_12, window_bounds = array<i64: 32, 64>}, {pipeline_mode = #tpu.pipeline_mode<synchronous>, transform_indices = @transform_13, window_bounds = array<i64: 1, 64>}, {pipeline_mode = #tpu.pipeline_mode<synchronous>, transform_indices = @transform_14, window_bounds = array<i64: 64, 32>}, {pipeline_mode = #tpu.pipeline_mode<synchronous>, transform_indices = @transform_15, window_bounds = array<i64: 1, 32>}, {pipeline_mode = #tpu.pipeline_mode<synchronous>, transform_indices = @transform_16, window_bounds = array<i64: 1, 32>}, {pipeline_mode = #tpu.pipeline_mode<synchronous>, transform_indices = @transform_17, window_bounds = array<i64: 1, 32>}, {transform_indices = @transform_18, window_bounds = array<i64: 1, 8, 32>}]} {
    %c0 = arith.constant 0 : index
    %c0_0 = arith.constant 0 : index
    %c0_1 = arith.constant 0 : index
    %0 = vector.load %arg1[%c0, %c0_0, %c0_1] : memref<1x8x32xf32, #tpu.memory_space<vmem>>, vector<1x8x32xf32>
    %1 = vector.shape_cast %0 : vector<1x8x32xf32> to vector<8x32xf32>
    %2 = arith.truncf %1 : vector<8x32xf32> to vector<8x32xbf16>
    %c0_2 = arith.constant 0 : index
    %c0_3 = arith.constant 0 : index
    %3 = vector.load %arg3[%c0_2, %c0_3] : memref<32x32xbf16, #tpu.memory_space<vmem>>, vector<32x32xbf16>
    %cst = arith.constant dense<0.000000e+00> : vector<8x32xf32>
    %4 = tpu.matmul %2, %3, %cst {dimension_numbers = #tpu.dot_dimension_numbers<[1], [0], [0], [1], [0, 0, 1, 1], [], []>} : vector<8x32xbf16>, vector<32x32xbf16>, vector<8x32xf32> -> vector<8x32xf32>
    %c0_4 = arith.constant 0 : index
    %c0_5 = arith.constant 0 : index
    %5 = vector.load %arg7[%c0_4, %c0_5] : memref<1x32xf32, #tpu.memory_space<vmem>>, vector<1x32xf32>
    %6 = vector.broadcast %5 : vector<1x32xf32> to vector<8x32xf32>
    %7 = arith.addf %4, %6 : vector<8x32xf32>
    %cst_6 = arith.constant 0.353553385 : f32
    %8 = vector.broadcast %cst_6 : f32 to vector<8x32xf32>
    %9 = arith.mulf %7, %8 : vector<8x32xf32>
    %c0_7 = arith.constant 0 : index
    %c0_8 = arith.constant 0 : index
    %10 = vector.load %arg4[%c0_7, %c0_8] : memref<32x32xbf16, #tpu.memory_space<vmem>>, vector<32x32xbf16>
    %cst_9 = arith.constant dense<0.000000e+00> : vector<8x32xf32>
    %11 = tpu.matmul %2, %10, %cst_9 {dimension_numbers = #tpu.dot_dimension_numbers<[1], [0], [0], [1], [0, 0, 1, 1], [], []>} : vector<8x32xbf16>, vector<32x32xbf16>, vector<8x32xf32> -> vector<8x32xf32>
    %c0_10 = arith.constant 0 : index
    %c0_11 = arith.constant 0 : index
    %12 = vector.load %arg8[%c0_10, %c0_11] : memref<1x32xf32, #tpu.memory_space<vmem>>, vector<1x32xf32>
    %13 = vector.broadcast %12 : vector<1x32xf32> to vector<8x32xf32>
    %14 = arith.addf %11, %13 : vector<8x32xf32>
    %c0_12 = arith.constant 0 : index
    %c0_13 = arith.constant 0 : index
    %15 = vector.load %arg5[%c0_12, %c0_13] : memref<32x32xbf16, #tpu.memory_space<vmem>>, vector<32x32xbf16>
    %cst_14 = arith.constant dense<0.000000e+00> : vector<8x32xf32>
    %16 = tpu.matmul %2, %15, %cst_14 {dimension_numbers = #tpu.dot_dimension_numbers<[1], [0], [0], [1], [0, 0, 1, 1], [], []>} : vector<8x32xbf16>, vector<32x32xbf16>, vector<8x32xf32> -> vector<8x32xf32>
    %c0_15 = arith.constant 0 : index
    %c0_16 = arith.constant 0 : index
    %17 = vector.load %arg9[%c0_15, %c0_16] : memref<1x32xf32, #tpu.memory_space<vmem>>, vector<1x32xf32>
    %18 = vector.broadcast %17 : vector<1x32xf32> to vector<8x32xf32>
    %19 = arith.addf %16, %18 : vector<8x32xf32>
    %c0_17 = arith.constant 0 : index
    %c0_18 = arith.constant 0 : index
    %c0_19 = arith.constant 0 : index
    %20 = vector.load %arg2[%c0_17, %c0_18, %c0_19] : memref<1x1x8xf32, #tpu.memory_space<vmem>>, vector<1x1x8xf32>
    %21 = arith.truncf %9 : vector<8x32xf32> to vector<8x32xbf16>
    %22 = arith.truncf %14 : vector<8x32xf32> to vector<8x32xbf16>
    %23 = arith.truncf %19 : vector<8x32xf32> to vector<8x32xbf16>
    %24 = tpu.transpose %21, [1, 0] : vector<8x32xbf16> -> vector<32x8xbf16>
    %25 = vector.shape_cast %24 : vector<32x8xbf16> to vector<4x8x8xbf16>
    %26 = tpu.transpose %22, [1, 0] : vector<8x32xbf16> -> vector<32x8xbf16>
    %27 = vector.shape_cast %26 : vector<32x8xbf16> to vector<4x8x8xbf16>
    %28 = tpu.transpose %23, [1, 0] : vector<8x32xbf16> -> vector<32x8xbf16>
    %29 = vector.shape_cast %28 : vector<32x8xbf16> to vector<4x8x8xbf16>
    %30 = vector.shape_cast %20 : vector<1x1x8xf32> to vector<1x8xf32>
    "tpu.trace_start"() <{level = 10 : i32, message = "hcq,hck->hqk"}> : () -> ()
    %cst_20 = arith.constant dense<0.000000e+00> : vector<4x8x8xf32>
    %31 = tpu.matmul %25, %27, %cst_20 {dimension_numbers = #tpu.dot_dimension_numbers<[1], [1], [2], [2], [0, 0, 0, 2, 1, 2], [0], [0]>} : vector<4x8x8xbf16>, vector<4x8x8xbf16>, vector<4x8x8xf32> -> vector<4x8x8xf32>
    "tpu.trace_stop"() : () -> ()
    %32 = vector.shape_cast %30 : vector<1x8xf32> to vector<1x1x8xf32>
    %33 = vector.broadcast %32 : vector<1x1x8xf32> to vector<4x8x8xf32>
    %34 = arith.addf %31, %33 : vector<4x8x8xf32>
    %cst_21 = arith.constant dense<0xFF800000> : vector<4x8xf32>
    %35 = vector.multi_reduction <maximumf>, %34, %cst_21 [2] : vector<4x8x8xf32> to vector<4x8xf32>
    %36 = vector.shape_cast %35 : vector<4x8xf32> to vector<4x8x1xf32>
    %37 = vector.broadcast %36 : vector<4x8x1xf32> to vector<4x8x8xf32>
    %38 = arith.subf %34, %37 : vector<4x8x8xf32>
    %39 = math.exp %38 : vector<4x8x8xf32>
    %cst_22 = arith.constant dense<0.000000e+00> : vector<4x8xf32>
    %40 = vector.multi_reduction <add>, %39, %cst_22 [2] : vector<4x8x8xf32> to vector<4x8xf32>
    %41 = vector.shape_cast %40 : vector<4x8xf32> to vector<4x8x1xf32>
    %42 = arith.truncf %39 : vector<4x8x8xf32> to vector<4x8x8xbf16>
    "tpu.trace_start"() <{level = 10 : i32, message = "hck,hqk->hcq"}> : () -> ()
    %cst_23 = arith.constant dense<0.000000e+00> : vector<4x8x8xf32>
    %43 = tpu.matmul %29, %42, %cst_23 {dimension_numbers = #tpu.dot_dimension_numbers<[2], [2], [1], [1], [0, 0, 0, 1, 1, 1], [0], [0]>} : vector<4x8x8xbf16>, vector<4x8x8xbf16>, vector<4x8x8xf32> -> vector<4x8x8xf32>
    "tpu.trace_stop"() : () -> ()
    %44 = tpu.reciprocal %41 {approx = true} : vector<4x8x1xf32> -> vector<4x8x1xf32>
    %45 = tpu.transpose %44, [0, 2, 1] : vector<4x8x1xf32> -> vector<4x1x8xf32>
    %46 = vector.broadcast %45 : vector<4x1x8xf32> to vector<4x8x8xf32>
    %47 = arith.mulf %43, %46 : vector<4x8x8xf32>
    %48 = vector.shape_cast %47 : vector<4x8x8xf32> to vector<32x8xf32>
    %49 = tpu.transpose %48, [1, 0] : vector<32x8xf32> -> vector<8x32xf32>
    %50 = arith.truncf %49 : vector<8x32xf32> to vector<8x32xbf16>
    %c0_24 = arith.constant 0 : index
    %c0_25 = arith.constant 0 : index
    %51 = vector.load %arg20[%c0_24, %c0_25] : memref<8x32xbf16, #tpu.memory_space<vmem>>, vector<8x32xbf16>
    tpu.vector_store %arg20[%c0_24, %c0_25], %50 {strides = array<i32>} : memref<8x32xbf16, #tpu.memory_space<vmem>>, vector<8x32xbf16>,
    %c0_26 = arith.constant 0 : index
    %c0_27 = arith.constant 0 : index
    %52 = vector.load %arg20[%c0_26, %c0_27] : memref<8x32xbf16, #tpu.memory_space<vmem>>, vector<8x32xbf16>
    %c0_28 = arith.constant 0 : index
    %c0_29 = arith.constant 0 : index
    %53 = vector.load %arg6[%c0_28, %c0_29] : memref<32x32xbf16, #tpu.memory_space<vmem>>, vector<32x32xbf16>
    %cst_30 = arith.constant dense<0.000000e+00> : vector<8x32xf32>
    %54 = tpu.matmul %52, %53, %cst_30 {dimension_numbers = #tpu.dot_dimension_numbers<[1], [0], [0], [1], [0, 0, 1, 1], [], []>} : vector<8x32xbf16>, vector<32x32xbf16>, vector<8x32xf32> -> vector<8x32xf32>
    %c0_31 = arith.constant 0 : index
    %c0_32 = arith.constant 0 : index
    %55 = vector.load %arg10[%c0_31, %c0_32] : memref<1x32xf32, #tpu.memory_space<vmem>>, vector<1x32xf32>
    %56 = vector.broadcast %55 : vector<1x32xf32> to vector<8x32xf32>
    %57 = arith.addf %54, %56 : vector<8x32xf32>
    %58 = arith.addf %1, %57 : vector<8x32xf32>
    %cst_33 = arith.constant dense<0.000000e+00> : vector<8xf32>
    %59 = vector.multi_reduction <add>, %58, %cst_33 [1] : vector<8x32xf32> to vector<8xf32>
    %60 = vector.shape_cast %59 : vector<8xf32> to vector<8x1xf32>
    %cst_34 = arith.constant 3.200000e+01 : f32
    %61 = vector.broadcast %cst_34 : f32 to vector<8x1xf32>
    %62 = arith.divf %60, %61 : vector<8x1xf32>
    %63 = vector.broadcast %62 : vector<8x1xf32> to vector<8x32xf32>
    %64 = arith.subf %58, %63 : vector<8x32xf32>
    %65 = arith.mulf %64, %64 : vector<8x32xf32>
    %cst_35 = arith.constant dense<0.000000e+00> : vector<8xf32>
    %66 = vector.multi_reduction <add>, %65, %cst_35 [1] : vector<8x32xf32> to vector<8xf32>
    %67 = vector.shape_cast %66 : vector<8xf32> to vector<8x1xf32>
    %cst_36 = arith.constant 3.200000e+01 : f32
    %68 = vector.broadcast %cst_36 : f32 to vector<8x1xf32>
    %69 = arith.divf %67, %68 : vector<8x1xf32>
    %70 = vector.broadcast %62 : vector<8x1xf32> to vector<8x32xf32>
    %71 = arith.subf %58, %70 : vector<8x32xf32>
    %cst_37 = arith.constant 9.99999974E-6 : f32
    %72 = vector.broadcast %cst_37 : f32 to vector<8x1xf32>
    %73 = arith.addf %69, %72 : vector<8x1xf32>
    %74 = math.rsqrt %73 : vector<8x1xf32>
    %75 = vector.broadcast %74 : vector<8x1xf32> to vector<8x32xf32>
    %76 = arith.mulf %71, %75 : vector<8x32xf32>
    %c0_38 = arith.constant 0 : index
    %c0_39 = arith.constant 0 : index
    %77 = vector.load %arg11[%c0_38, %c0_39] : memref<1x32xf32, #tpu.memory_space<vmem>>, vector<1x32xf32>
    %78 = vector.broadcast %77 : vector<1x32xf32> to vector<8x32xf32>
    %79 = arith.mulf %76, %78 : vector<8x32xf32>
    %c0_40 = arith.constant 0 : index
    %c0_41 = arith.constant 0 : index
    %80 = vector.load %arg12[%c0_40, %c0_41] : memref<1x32xf32, #tpu.memory_space<vmem>>, vector<1x32xf32>
    %81 = vector.broadcast %80 : vector<1x32xf32> to vector<8x32xf32>
    %82 = arith.addf %79, %81 : vector<8x32xf32>
    %83 = arith.truncf %82 : vector<8x32xf32> to vector<8x32xbf16>
    %c0_42 = arith.constant 0 : index
    %c0_43 = arith.constant 0 : index
    %84 = vector.load %arg13[%c0_42, %c0_43] : memref<32x64xbf16, #tpu.memory_space<vmem>>, vector<32x64xbf16>
    %cst_44 = arith.constant dense<0.000000e+00> : vector<8x64xf32>
    %85 = tpu.matmul %83, %84, %cst_44 {dimension_numbers = #tpu.dot_dimension_numbers<[1], [0], [0], [1], [0, 0, 1, 1], [], []>} : vector<8x32xbf16>, vector<32x64xbf16>, vector<8x64xf32> -> vector<8x64xf32>
    %c0_45 = arith.constant 0 : index
    %c0_46 = arith.constant 0 : index
    %86 = vector.load %arg14[%c0_45, %c0_46] : memref<1x64xf32, #tpu.memory_space<vmem>>, vector<1x64xf32>
    %87 = vector.broadcast %86 : vector<1x64xf32> to vector<8x64xf32>
    %88 = arith.addf %85, %87 : vector<8x64xf32>
    %cst_47 = arith.constant 0.000000e+00 : f32
    %89 = vector.broadcast %cst_47 : f32 to vector<8x64xf32>
    %90 = arith.maximumf %88, %89 : vector<8x64xf32>
    %91 = arith.truncf %90 : vector<8x64xf32> to vector<8x64xbf16>
    %c0_48 = arith.constant 0 : index
    %c0_49 = arith.constant 0 : index
    %92 = vector.load %arg15[%c0_48, %c0_49] : memref<64x32xbf16, #tpu.memory_space<vmem>>, vector<64x32xbf16>
    %cst_50 = arith.constant dense<0.000000e+00> : vector<8x32xf32>
    %93 = tpu.matmul %91, %92, %cst_50 {dimension_numbers = #tpu.dot_dimension_numbers<[1], [0], [0], [1], [0, 0, 1, 1], [], []>} : vector<8x64xbf16>, vector<64x32xbf16>, vector<8x32xf32> -> vector<8x32xf32>
    %c0_51 = arith.constant 0 : index
    %c0_52 = arith.constant 0 : index
    %94 = vector.load %arg16[%c0_51, %c0_52] : memref<1x32xf32, #tpu.memory_space<vmem>>, vector<1x32xf32>
    %95 = vector.broadcast %94 : vector<1x32xf32> to vector<8x32xf32>
    %96 = arith.addf %93, %95 : vector<8x32xf32>
    %97 = arith.addf %82, %96 : vector<8x32xf32>
    %cst_53 = arith.constant dense<0.000000e+00> : vector<8xf32>
    %98 = vector.multi_reduction <add>, %97, %cst_53 [1] : vector<8x32xf32> to vector<8xf32>
    %99 = vector.shape_cast %98 : vector<8xf32> to vector<8x1xf32>
    %cst_54 = arith.constant 3.200000e+01 : f32
    %100 = vector.broadcast %cst_54 : f32 to vector<8x1xf32>
    %101 = arith.divf %99, %100 : vector<8x1xf32>
    %102 = vector.broadcast %101 : vector<8x1xf32> to vector<8x32xf32>
    %103 = arith.subf %97, %102 : vector<8x32xf32>
    %104 = arith.mulf %103, %103 : vector<8x32xf32>
    %cst_55 = arith.constant dense<0.000000e+00> : vector<8xf32>
    %105 = vector.multi_reduction <add>, %104, %cst_55 [1] : vector<8x32xf32> to vector<8xf32>
    %106 = vector.shape_cast %105 : vector<8xf32> to vector<8x1xf32>
    %cst_56 = arith.constant 3.200000e+01 : f32
    %107 = vector.broadcast %cst_56 : f32 to vector<8x1xf32>
    %108 = arith.divf %106, %107 : vector<8x1xf32>
    %109 = vector.broadcast %101 : vector<8x1xf32> to vector<8x32xf32>
    %110 = arith.subf %97, %109 : vector<8x32xf32>
    %cst_57 = arith.constant 9.99999974E-6 : f32
    %111 = vector.broadcast %cst_57 : f32 to vector<8x1xf32>
    %112 = arith.addf %108, %111 : vector<8x1xf32>
    %113 = math.rsqrt %112 : vector<8x1xf32>
    %114 = vector.broadcast %113 : vector<8x1xf32> to vector<8x32xf32>
    %115 = arith.mulf %110, %114 : vector<8x32xf32>
    %c0_58 = arith.constant 0 : index
    %c0_59 = arith.constant 0 : index
    %116 = vector.load %arg17[%c0_58, %c0_59] : memref<1x32xf32, #tpu.memory_space<vmem>>, vector<1x32xf32>
    %117 = vector.broadcast %116 : vector<1x32xf32> to vector<8x32xf32>
    %118 = arith.mulf %115, %117 : vector<8x32xf32>
    %c0_60 = arith.constant 0 : index
    %c0_61 = arith.constant 0 : index
    %119 = vector.load %arg18[%c0_60, %c0_61] : memref<1x32xf32, #tpu.memory_space<vmem>>, vector<1x32xf32>
    %120 = vector.broadcast %119 : vector<1x32xf32> to vector<8x32xf32>
    %121 = arith.addf %118, %120 : vector<8x32xf32>
    %122 = vector.shape_cast %121 : vector<8x32xf32> to vector<1x8x32xf32>
    %c0_62 = arith.constant 0 : index
    %c0_63 = arith.constant 0 : index
    %c0_64 = arith.constant 0 : index
    %123 = vector.load %arg19[%c0_62, %c0_63, %c0_64] : memref<1x8x32xf32, #tpu.memory_space<vmem>>, vector<1x8x32xf32>
    tpu.vector_store %arg19[%c0_62, %c0_63, %c0_64], %122 {strides = array<i32>} : memref<1x8x32xf32, #tpu.memory_space<vmem>>, vector<1x8x32xf32>,
    return
  }
  func.func @transform_0(%arg0: i32) -> (i32, i32, i32) {
    %c0_i32 = arith.constant 0 : i32
    %c0_i32_0 = arith.constant 0 : i32
    %c0_i32_1 = arith.constant 0 : i32
    return %arg0, %c0_i32, %c0_i32_0 : i32, i32, i32
  }
  func.func @transform_1(%arg0: i32) -> (i32, i32, i32) {
    %c0_i32 = arith.constant 0 : i32
    %c0_i32_0 = arith.constant 0 : i32
    %c0_i32_1 = arith.constant 0 : i32
    return %arg0, %c0_i32, %c0_i32_0 : i32, i32, i32
  }
  func.func @transform_2(%arg0: i32) -> (i32, i32) {
    %c0_i32 = arith.constant 0 : i32
    %c0_i32_0 = arith.constant 0 : i32
    %c0_i32_1 = arith.constant 0 : i32
    return %c0_i32, %c0_i32_0 : i32, i32
  }
  func.func @transform_3(%arg0: i32) -> (i32, i32) {
    %c0_i32 = arith.constant 0 : i32
    %c0_i32_0 = arith.constant 0 : i32
    %c0_i32_1 = arith.constant 0 : i32
    return %c0_i32, %c0_i32_0 : i32, i32
  }
  func.func @transform_4(%arg0: i32) -> (i32, i32) {
    %c0_i32 = arith.constant 0 : i32
    %c0_i32_0 = arith.constant 0 : i32
    %c0_i32_1 = arith.constant 0 : i32
    return %c0_i32, %c0_i32_0 : i32, i32
  }
  func.func @transform_5(%arg0: i32) -> (i32, i32) {
    %c0_i32 = arith.constant 0 : i32
    %c0_i32_0 = arith.constant 0 : i32
    %c0_i32_1 = arith.constant 0 : i32
    return %c0_i32, %c0_i32_0 : i32, i32
  }
  func.func @transform_6(%arg0: i32) -> (i32, i32) {
    %c0_i32 = arith.constant 0 : i32
    %c0_i32_0 = arith.constant 0 : i32
    %c0_i32_1 = arith.constant 0 : i32
    return %c0_i32, %c0_i32_0 : i32, i32
  }
  func.func @transform_7(%arg0: i32) -> (i32, i32) {
    %c0_i32 = arith.constant 0 : i32
    %c0_i32_0 = arith.constant 0 : i32
    %c0_i32_1 = arith.constant 0 : i32
    return %c0_i32, %c0_i32_0 : i32, i32
  }
  func.func @transform_8(%arg0: i32) -> (i32, i32) {
    %c0_i32 = arith.constant 0 : i32
    %c0_i32_0 = arith.constant 0 : i32
    %c0_i32_1 = arith.constant 0 : i32
    return %c0_i32, %c0_i32_0 : i32, i32
  }
  func.func @transform_9(%arg0: i32) -> (i32, i32) {
    %c0_i32 = arith.constant 0 : i32
    %c0_i32_0 = arith.constant 0 : i32
    %c0_i32_1 = arith.constant 0 : i32
    return %c0_i32, %c0_i32_0 : i32, i32
  }
  func.func @transform_10(%arg0: i32) -> (i32, i32) {
    %c0_i32 = arith.constant 0 : i32
    %c0_i32_0 = arith.constant 0 : i32
    %c0_i32_1 = arith.constant 0 : i32
    return %c0_i32, %c0_i32_0 : i32, i32
  }
  func.func @transform_11(%arg0: i32) -> (i32, i32) {
    %c0_i32 = arith.constant 0 : i32
    %c0_i32_0 = arith.constant 0 : i32
    %c0_i32_1 = arith.constant 0 : i32
    return %c0_i32, %c0_i32_0 : i32, i32
  }
  func.func @transform_12(%arg0: i32) -> (i32, i32) {
    %c0_i32 = arith.constant 0 : i32
    %c0_i32_0 = arith.constant 0 : i32
    %c0_i32_1 = arith.constant 0 : i32
    return %c0_i32, %c0_i32_0 : i32, i32
  }
  func.func @transform_13(%arg0: i32) -> (i32, i32) {
    %c0_i32 = arith.constant 0 : i32
    %c0_i32_0 = arith.constant 0 : i32
    %c0_i32_1 = arith.constant 0 : i32
    return %c0_i32, %c0_i32_0 : i32, i32
  }
  func.func @transform_14(%arg0: i32) -> (i32, i32) {
    %c0_i32 = arith.constant 0 : i32
    %c0_i32_0 = arith.constant 0 : i32
    %c0_i32_1 = arith.constant 0 : i32
    return %c0_i32, %c0_i32_0 : i32, i32
  }
  func.func @transform_15(%arg0: i32) -> (i32, i32) {
    %c0_i32 = arith.constant 0 : i32
    %c0_i32_0 = arith.constant 0 : i32
    %c0_i32_1 = arith.constant 0 : i32
    return %c0_i32, %c0_i32_0 : i32, i32
  }
  func.func @transform_16(%arg0: i32) -> (i32, i32) {
    %c0_i32 = arith.constant 0 : i32
    %c0_i32_0 = arith.constant 0 : i32
    %c0_i32_1 = arith.constant 0 : i32
    return %c0_i32, %c0_i32_0 : i32, i32
  }
  func.func @transform_17(%arg0: i32) -> (i32, i32) {
    %c0_i32 = arith.constant 0 : i32
    %c0_i32_0 = arith.constant 0 : i32
    %c0_i32_1 = arith.constant 0 : i32
    return %c0_i32, %c0_i32_0 : i32, i32
  }
  func.func @transform_18(%arg0: i32) -> (i32, i32, i32) {
    %c0_i32 = arith.constant 0 : i32
    %c0_i32_0 = arith.constant 0 : i32
    %c0_i32_1 = arith.constant 0 : i32
    return %arg0, %c0_i32, %c0_i32_0 : i32, i32, i32
  }
}

</mosaic_0001>

<llo_original>
// kernel: tpu_custom_call.1
$region0: #{tpu_custom_call.1}
  #allocation0 [shape = 'u32[]', space=smem, size = 0x4, offset = 0x4, fixed_abs, tag = 'smem constant byte address 0x4 - core index']
  #allocation1 [shape = 'u32[144,128]{1,0:T(1,128)}', space=vmem, size = 0x12000, scoped, tag = 'internal scratch']
  #allocation2 [shape = 'bf16[8,32]{1,0:T(8,128)(2,1)}', space=vmem, size = 0x800, scoped, tag = 'scratch operand']
  %s0 = inlined_call_operand.vmem [shape: f32[2,8,32], index: 0, kind: input, shape index: {}]
  %s1 = inlined_call_operand.vmem [shape: f32[2,1,8], index: 1, kind: input, shape index: {}]
  %s2 = inlined_call_operand.vmem [shape: bf16[32,32], index: 2, kind: input, shape index: {}]
  %s3 = inlined_call_operand.vmem [shape: bf16[32,32], index: 3, kind: input, shape index: {}]
  %s4 = inlined_call_operand.hbm [shape: bf16[32,32], index: 4, kind: input, shape index: {}]
  %s5 = inlined_call_operand.hbm [shape: bf16[32,32], index: 5, kind: input, shape index: {}]
  %s6 = inlined_call_operand.hbm [shape: f32[1,32], index: 6, kind: input, shape index: {}]
  %s7 = inlined_call_operand.hbm [shape: f32[1,32], index: 7, kind: input, shape index: {}]
  %s8 = inlined_call_operand.hbm [shape: f32[1,32], index: 8, kind: input, shape index: {}]
  %s9 = inlined_call_operand.hbm [shape: f32[1,32], index: 9, kind: input, shape index: {}]
  %s10 = inlined_call_operand.vmem [shape: f32[1,32], index: 10, kind: input, shape index: {}]
  %s11 = inlined_call_operand.vmem [shape: f32[1,32], index: 11, kind: input, shape index: {}]
  %s12 = inlined_call_operand.vmem [shape: bf16[32,64], index: 12, kind: input, shape index: {}]
  %s13 = inlined_call_operand.vmem [shape: f32[1,64], index: 13, kind: input, shape index: {}]
  %s14 = inlined_call_operand.vmem [shape: bf16[64,32], index: 14, kind: input, shape index: {}]
  %s15 = inlined_call_operand.vmem [shape: f32[1,32], index: 15, kind: input, shape index: {}]
  %s16 = inlined_call_operand.vmem [shape: f32[1,32], index: 16, kind: input, shape index: {}]
  %s17 = inlined_call_operand.vmem [shape: f32[1,32], index: 17, kind: input, shape index: {}]
  %s18 = inlined_call_operand.hbm [shape: f32[2,8,32], index: 18, kind: output, shape index: {}]
  %s19 = sld [smem:[#allocation0]]
  $region129: #{tpu_custom_call.1} parent=0
    _
  %s21 = ssub.s32 1, %s19
  %s22 = scalar_select 0, %s21, %s19
  $region1: #{tpu_custom_call.1} parent=0
    #allocation3 [shape = 'u8[8192]{0}', space=vmem, size = 0x2000, scoped, tag = 'input window, operand 4, single buffered']
    #allocation4 [shape = 's32[2]{0}', space=sflag, size = 0x8, scoped, tag = 'scoped memory for tpu_custom_call.1']
    #allocation5 [shape = 's32[2]{0}', space=sflag, size = 0x8, scoped, tag = 'scoped memory for tpu_custom_call.1']
    #allocation6 [shape = 'u8[8192]{0}', space=vmem, size = 0x2000, scoped, tag = 'input window, operand 5, single buffered']
    #allocation7 [shape = 's32[1]{0}', space=sflag, size = 0x4, scoped, tag = 'scoped memory for tpu_custom_call.1']
    #allocation8 [shape = 'u8[512]{0}', space=vmem, size = 0x400, scoped, tag = 'input window, operand 6, single buffered']
    #allocation9 [shape = 'u8[512]{0}', space=vmem, size = 0x400, scoped, tag = 'input window, operand 7, single buffered']
    #allocation10 [shape = 's32[1]{0}', space=sflag, size = 0x4, scoped, tag = 'scoped memory for tpu_custom_call.1']
    #allocation11 [shape = 'u8[512]{0}', space=vmem, size = 0x400, scoped, tag = 'input window, operand 8, single buffered']
    #allocation12 [shape = 'u8[512]{0}', space=vmem, size = 0x400, scoped, tag = 'input window, operand 9, single buffered']
    #allocation13 [shape = 's32[1]{0}', space=sflag, size = 0x4, scoped, tag = 'scoped memory for tpu_custom_call.1']
    #allocation14 [shape = 'u8[8192]{0}', space=vmem, size = 0x2000, scoped, tag = 'output window, operand 0']
    %23 = vsyncpa [#allocation4], 0
    %24 = vsyncpa [#allocation7], 0
    %25 = vsyncpa [#allocation10], 0
    %26 = vsyncpa [#allocation13], 0
    %27 = vsyncpa [#allocation5], 0
    %s28 = scalar_lea.sflag [#allocation5], 1
    %29 = vsyncpa %s28, 0
    loop: start=0, step=1, limit=4
    $region2: #{tpu_custom_call.1} parent=1 // loop_pre_header
      _
    $region3: #{tpu_custom_call.1} parent=1 // loop_header
      %s31 = sphi 0, %s35
      %p32 = scmp.ge.s32.totalorder %s31, 4
      %s41 = sphi 0, %s43
      %s44 = sphi 0, %s41
      %s45 = sphi 0, %s44
      %s61 = sphi 0, %s45
      %s67 = sphi 0, %s69
      %s70 = sphi 0, %s67
      %s71 = sphi 0, %s70
      %s87 = sphi 0, %s71
      %s91 = sphi 0, %s91
      %s93 = sphi 0, %s91
      %s94 = sphi 0, %s93
      %s108 = sphi 0, %s94
      %s112 = sphi 0, %s112
      %s114 = sphi 0, %s112
      %s115 = sphi 0, %s114
      %s129 = sphi 0, %s115
      %s133 = sphi 0, %s133
      %s135 = sphi 0, %s133
      %s136 = sphi 0, %s135
      %s150 = sphi 0, %s136
      %s154 = sphi 0, %s154
      %s156 = sphi 0, %s154
      %s157 = sphi 0, %s156
      %s171 = sphi 0, %s157
      %s175 = sphi 0, %s175
      %s177 = sphi 0, %s175
      %s178 = sphi 0, %s177
      %s192 = sphi 0, %s178
      %s196 = sphi 0, %s196
      %s198 = sphi 0, %s196
      %s199 = sphi 0, %s198
      %s213 = sphi 0, %s199
      %s217 = sphi 0, %s217
      %s219 = sphi 0, %s217
      %s220 = sphi 0, %s219
      %s234 = sphi 0, %s220
      %s238 = sphi 0, %s238
      %s240 = sphi 0, %s238
      %s241 = sphi 0, %s240
      %s255 = sphi 0, %s241
      %s259 = sphi 0, %s259
      %s261 = sphi 0, %s259
      %s262 = sphi 0, %s261
      %s276 = sphi 0, %s262
      %s280 = sphi 0, %s280
      %s282 = sphi 0, %s280
      %s283 = sphi 0, %s282
      %s297 = sphi 0, %s283
      %s301 = sphi 0, %s301
      %s303 = sphi 0, %s301
      %s304 = sphi 0, %s303
      %s318 = sphi 0, %s304
      %s322 = sphi 0, %s322
      %s324 = sphi 0, %s322
      %s325 = sphi 0, %s324
      %s339 = sphi 0, %s325
      %s343 = sphi 0, %s343
      %s345 = sphi 0, %s343
      %s346 = sphi 0, %s345
      %s360 = sphi 0, %s346
      %s364 = sphi 0, %s364
      %s366 = sphi 0, %s364
      %s367 = sphi 0, %s366
      %s381 = sphi 0, %s367
      %s385 = sphi 0, %s385
      %s387 = sphi 0, %s385
      %s388 = sphi 0, %s387
      %s402 = sphi 0, %s388
      %s406 = sphi 0, %s406
      %s408 = sphi 0, %s406
      %s409 = sphi 0, %s408
      %s423 = sphi 0, %s409
      %s429 = sphi 0, %s431
      %s432 = sphi 0, %s429
      %s433 = sphi 0, %s432
      %s449 = sphi 0, %s433
    $region4: #{tpu_custom_call.1} parent=1 // loop_header_branch
      %34 = sbr.rel (%p32) target = $region8
    $region5: #{tpu_custom_call.1} parent=1 // loop_body
      %s36 = ssub.s32 %s31, 1
      %s37 = ssub.s32 %s31, 2
      %s38 = sadd.s32 %s31, 1
      %s39 = ssub.s32 %s31, %s38
      %p40 = scmp.eq.s32.totalorder %s39, 0
      %s42 = sadd.s32 %s41, 1
      %s43 = scalar_select %p40, %s41, %s42
      %p46 = pneg %p40
      %p47 = scmp.eq.s32.totalorder %s31, 1
      %p48 = por %p46, %p47
      %p49 = scmp.ne.s32.totalorder %s41, %s44
      %p50 = scmp.eq.s32.totalorder %s31, 0
      %p51 = por %p49, %p50
      %p52 = scmp.ne.s32.totalorder %s41, %s44
      %p53 = scmp.eq.s32.totalorder %s36, 1
      %p54 = por %p52, %p53
      %p55 = scmp.ne.s32.totalorder %s44, %s45
      %p56 = scmp.eq.s32.totalorder %s36, 0
      %p57 = por %p55, %p56
      %p58 = scmp.ne.s32.totalorder %s44, %s45
      %p59 = scmp.eq.s32.totalorder %s37, 1
      %p60 = por %p58, %p59
      %p62 = scmp.ne.s32.totalorder %s45, %s61
      %p63 = scmp.eq.s32.totalorder %s37, 0
      %p64 = por %p62, %p63
      %s65 = ssub.s32 %s31, %s38
      %p66 = scmp.eq.s32.totalorder %s65, 0
      %s68 = sadd.s32 %s67, 1
      %s69 = scalar_select %p66, %s67, %s68
      %p72 = pneg %p66
      %p73 = scmp.eq.s32.totalorder %s31, 1
      %p74 = por %p72, %p73
      %p75 = scmp.ne.s32.totalorder %s67, %s70
      %p76 = scmp.eq.s32.totalorder %s31, 0
      %p77 = por %p75, %p76
      %p78 = scmp.ne.s32.totalorder %s67, %s70
      %p79 = scmp.eq.s32.totalorder %s36, 1
      %p80 = por %p78, %p79
      %p81 = scmp.ne.s32.totalorder %s70, %s71
      %p82 = scmp.eq.s32.totalorder %s36, 0
      %p83 = por %p81, %p82
      %p84 = scmp.ne.s32.totalorder %s70, %s71
      %p85 = scmp.eq.s32.totalorder %s37, 1
      %p86 = por %p84, %p85
      %p88 = scmp.ne.s32.totalorder %s71, %s87
      %p89 = scmp.eq.s32.totalorder %s37, 0
      %p90 = por %p88, %p89
      %s92 = sadd.s32 %s91, 1
      %p95 = scmp.eq.s32.totalorder %s31, 1
      %p96 = scmp.ne.s32.totalorder %s91, %s93
      %p97 = scmp.eq.s32.totalorder %s31, 0
      %p98 = por %p96, %p97
      %p99 = scmp.ne.s32.totalorder %s91, %s93
      %p100 = scmp.eq.s32.totalorder %s36, 1
      %p101 = por %p99, %p100
      %p102 = scmp.ne.s32.totalorder %s93, %s94
      %p103 = scmp.eq.s32.totalorder %s36, 0
      %p104 = por %p102, %p103
      %p105 = scmp.ne.s32.totalorder %s93, %s94
      %p106 = scmp.eq.s32.totalorder %s37, 1
      %p107 = por %p105, %p106
      %p109 = scmp.ne.s32.totalorder %s94, %s108
      %p110 = scmp.eq.s32.totalorder %s37, 0
      %p111 = por %p109, %p110
      %s113 = sadd.s32 %s112, 1
      %p116 = scmp.eq.s32.totalorder %s31, 1
      %p117 = scmp.ne.s32.totalorder %s112, %s114
      %p118 = scmp.eq.s32.totalorder %s31, 0
      %p119 = por %p117, %p118
      %p120 = scmp.ne.s32.totalorder %s112, %s114
      %p121 = scmp.eq.s32.totalorder %s36, 1
      %p122 = por %p120, %p121
      %p123 = scmp.ne.s32.totalorder %s114, %s115
      %p124 = scmp.eq.s32.totalorder %s36, 0
      %p125 = por %p123, %p124
      %p126 = scmp.ne.s32.totalorder %s114, %s115
      %p127 = scmp.eq.s32.totalorder %s37, 1
      %p128 = por %p126, %p127
      %p130 = scmp.ne.s32.totalorder %s115, %s129
      %p131 = scmp.eq.s32.totalorder %s37, 0
      %p132 = por %p130, %p131
      %s134 = sadd.s32 %s133, 1
      %p137 = scmp.eq.s32.totalorder %s31, 1
      %p138 = scmp.ne.s32.totalorder %s133, %s135
      %p139 = scmp.eq.s32.totalorder %s31, 0
      %p140 = por %p138, %p139
      %p141 = scmp.ne.s32.totalorder %s133, %s135
      %p142 = scmp.eq.s32.totalorder %s36, 1
      %p143 = por %p141, %p142
      %p144 = scmp.ne.s32.totalorder %s135, %s136
      %p145 = scmp.eq.s32.totalorder %s36, 0
      %p146 = por %p144, %p145
      %p147 = scmp.ne.s32.totalorder %s135, %s136
      %p148 = scmp.eq.s32.totalorder %s37, 1
      %p149 = por %p147, %p148
      %p151 = scmp.ne.s32.totalorder %s136, %s150
      %p152 = scmp.eq.s32.totalorder %s37, 0
      %p153 = por %p151, %p152
      %s155 = sadd.s32 %s154, 1
      %p158 = scmp.eq.s32.totalorder %s31, 1
      %p159 = scmp.ne.s32.totalorder %s154, %s156
      %p160 = scmp.eq.s32.totalorder %s31, 0
      %p161 = por %p159, %p160
      %p162 = scmp.ne.s32.totalorder %s154, %s156
      %p163 = scmp.eq.s32.totalorder %s36, 1
      %p164 = por %p162, %p163
      %p165 = scmp.ne.s32.totalorder %s156, %s157
      %p166 = scmp.eq.s32.totalorder %s36, 0
      %p167 = por %p165, %p166
      %p168 = scmp.ne.s32.totalorder %s156, %s157
      %p169 = scmp.eq.s32.totalorder %s37, 1
      %p170 = por %p168, %p169
      %p172 = scmp.ne.s32.totalorder %s157, %s171
      %p173 = scmp.eq.s32.totalorder %s37, 0
      %p174 = por %p172, %p173
      %s176 = sadd.s32 %s175, 1
      %p179 = scmp.eq.s32.totalorder %s31, 1
      %p180 = scmp.ne.s32.totalorder %s175, %s177
      %p181 = scmp.eq.s32.totalorder %s31, 0
      %p182 = por %p180, %p181
      %p183 = scmp.ne.s32.totalorder %s175, %s177
      %p184 = scmp.eq.s32.totalorder %s36, 1
      %p185 = por %p183, %p184
      %p186 = scmp.ne.s32.totalorder %s177, %s178
      %p187 = scmp.eq.s32.totalorder %s36, 0
      %p188 = por %p186, %p187
      %p189 = scmp.ne.s32.totalorder %s177, %s178
      %p190 = scmp.eq.s32.totalorder %s37, 1
      %p191 = por %p189, %p190
      %p193 = scmp.ne.s32.totalorder %s178, %s192
      %p194 = scmp.eq.s32.totalorder %s37, 0
      %p195 = por %p193, %p194
      %s197 = sadd.s32 %s196, 1
      %p200 = scmp.eq.s32.totalorder %s31, 1
      %p201 = scmp.ne.s32.totalorder %s196, %s198
      %p202 = scmp.eq.s32.totalorder %s31, 0
      %p203 = por %p201, %p202
      %p204 = scmp.ne.s32.totalorder %s196, %s198
      %p205 = scmp.eq.s32.totalorder %s36, 1
      %p206 = por %p204, %p205
      %p207 = scmp.ne.s32.totalorder %s198, %s199
      %p208 = scmp.eq.s32.totalorder %s36, 0
      %p209 = por %p207, %p208
      %p210 = scmp.ne.s32.totalorder %s198, %s199
      %p211 = scmp.eq.s32.totalorder %s37, 1
      %p212 = por %p210, %p211
      %p214 = scmp.ne.s32.totalorder %s199, %s213
      %p215 = scmp.eq.s32.totalorder %s37, 0
      %p216 = por %p214, %p215
      %s218 = sadd.s32 %s217, 1
      %p221 = scmp.eq.s32.totalorder %s31, 1
      %p222 = scmp.ne.s32.totalorder %s217, %s219
      %p223 = scmp.eq.s32.totalorder %s31, 0
      %p224 = por %p222, %p223
      %p225 = scmp.ne.s32.totalorder %s217, %s219
      %p226 = scmp.eq.s32.totalorder %s36, 1
      %p227 = por %p225, %p226
      %p228 = scmp.ne.s32.totalorder %s219, %s220
      %p229 = scmp.eq.s32.totalorder %s36, 0
      %p230 = por %p228, %p229
      %p231 = scmp.ne.s32.totalorder %s219, %s220
      %p232 = scmp.eq.s32.totalorder %s37, 1
      %p233 = por %p231, %p232
      %p235 = scmp.ne.s32.totalorder %s220, %s234
      %p236 = scmp.eq.s32.totalorder %s37, 0
      %p237 = por %p235, %p236
      %s239 = sadd.s32 %s238, 1
      %p242 = scmp.eq.s32.totalorder %s31, 1
      %p243 = scmp.ne.s32.totalorder %s238, %s240
      %p244 = scmp.eq.s32.totalorder %s31, 0
      %p245 = por %p243, %p244
      %p246 = scmp.ne.s32.totalorder %s238, %s240
      %p247 = scmp.eq.s32.totalorder %s36, 1
      %p248 = por %p246, %p247
      %p249 = scmp.ne.s32.totalorder %s240, %s241
      %p250 = scmp.eq.s32.totalorder %s36, 0
      %p251 = por %p249, %p250
      %p252 = scmp.ne.s32.totalorder %s240, %s241
      %p253 = scmp.eq.s32.totalorder %s37, 1
      %p254 = por %p252, %p253
      %p256 = scmp.ne.s32.totalorder %s241, %s255
      %p257 = scmp.eq.s32.totalorder %s37, 0
      %p258 = por %p256, %p257
      %s260 = sadd.s32 %s259, 1
      %p263 = scmp.eq.s32.totalorder %s31, 1
      %p264 = scmp.ne.s32.totalorder %s259, %s261
      %p265 = scmp.eq.s32.totalorder %s31, 0
      %p266 = por %p264, %p265
      %p267 = scmp.ne.s32.totalorder %s259, %s261
      %p268 = scmp.eq.s32.totalorder %s36, 1
      %p269 = por %p267, %p268
      %p270 = scmp.ne.s32.totalorder %s261, %s262
      %p271 = scmp.eq.s32.totalorder %s36, 0
      %p272 = por %p270, %p271
      %p273 = scmp.ne.s32.totalorder %s261, %s262
      %p274 = scmp.eq.s32.totalorder %s37, 1
      %p275 = por %p273, %p274
      %p277 = scmp.ne.s32.totalorder %s262, %s276
      %p278 = scmp.eq.s32.totalorder %s37, 0
      %p279 = por %p277, %p278
      %s281 = sadd.s32 %s280, 1
      %p284 = scmp.eq.s32.totalorder %s31, 1
      %p285 = scmp.ne.s32.totalorder %s280, %s282
      %p286 = scmp.eq.s32.totalorder %s31, 0
      %p287 = por %p285, %p286
      %p288 = scmp.ne.s32.totalorder %s280, %s282
      %p289 = scmp.eq.s32.totalorder %s36, 1
      %p290 = por %p288, %p289
      %p291 = scmp.ne.s32.totalorder %s282, %s283
      %p292 = scmp.eq.s32.totalorder %s36, 0
      %p293 = por %p291, %p292
      %p294 = scmp.ne.s32.totalorder %s282, %s283
      %p295 = scmp.eq.s32.totalorder %s37, 1
      %p296 = por %p294, %p295
      %p298 = scmp.ne.s32.totalorder %s283, %s297
      %p299 = scmp.eq.s32.totalorder %s37, 0
      %p300 = por %p298, %p299
      %s302 = sadd.s32 %s301, 1
      %p305 = scmp.eq.s32.totalorder %s31, 1
      %p306 = scmp.ne.s32.totalorder %s301, %s303
      %p307 = scmp.eq.s32.totalorder %s31, 0
      %p308 = por %p306, %p307
      %p309 = scmp.ne.s32.totalorder %s301, %s303
      %p310 = scmp.eq.s32.totalorder %s36, 1
      %p311 = por %p309, %p310
      %p312 = scmp.ne.s32.totalorder %s303, %s304
      %p313 = scmp.eq.s32.totalorder %s36, 0
      %p314 = por %p312, %p313
      %p315 = scmp.ne.s32.totalorder %s303, %s304
      %p316 = scmp.eq.s32.totalorder %s37, 1
      %p317 = por %p315, %p316
      %p319 = scmp.ne.s32.totalorder %s304, %s318
      %p320 = scmp.eq.s32.totalorder %s37, 0
      %p321 = por %p319, %p320
      %s323 = sadd.s32 %s322, 1
      %p326 = scmp.eq.s32.totalorder %s31, 1
      %p327 = scmp.ne.s32.totalorder %s322, %s324
      %p328 = scmp.eq.s32.totalorder %s31, 0
      %p329 = por %p327, %p328
      %p330 = scmp.ne.s32.totalorder %s322, %s324
      %p331 = scmp.eq.s32.totalorder %s36, 1
      %p332 = por %p330, %p331
      %p333 = scmp.ne.s32.totalorder %s324, %s325
      %p334 = scmp.eq.s32.totalorder %s36, 0
      %p335 = por %p333, %p334
      %p336 = scmp.ne.s32.totalorder %s324, %s325
      %p337 = scmp.eq.s32.totalorder %s37, 1
      %p338 = por %p336, %p337
      %p340 = scmp.ne.s32.totalorder %s325, %s339
      %p341 = scmp.eq.s32.totalorder %s37, 0
      %p342 = por %p340, %p341
      %s344 = sadd.s32 %s343, 1
      %p347 = scmp.eq.s32.totalorder %s31, 1
      %p348 = scmp.ne.s32.totalorder %s343, %s345
      %p349 = scmp.eq.s32.totalorder %s31, 0
      %p350 = por %p348, %p349
      %p351 = scmp.ne.s32.totalorder %s343, %s345
      %p352 = scmp.eq.s32.totalorder %s36, 1
      %p353 = por %p351, %p352
      %p354 = scmp.ne.s32.totalorder %s345, %s346
      %p355 = scmp.eq.s32.totalorder %s36, 0
      %p356 = por %p354, %p355
      %p357 = scmp.ne.s32.totalorder %s345, %s346
      %p358 = scmp.eq.s32.totalorder %s37, 1
      %p359 = por %p357, %p358
      %p361 = scmp.ne.s32.totalorder %s346, %s360
      %p362 = scmp.eq.s32.totalorder %s37, 0
      %p363 = por %p361, %p362
      %s365 = sadd.s32 %s364, 1
      %p368 = scmp.eq.s32.totalorder %s31, 1
      %p369 = scmp.ne.s32.totalorder %s364, %s366
      %p370 = scmp.eq.s32.totalorder %s31, 0
      %p371 = por %p369, %p370
      %p372 = scmp.ne.s32.totalorder %s364, %s366
      %p373 = scmp.eq.s32.totalorder %s36, 1
      %p374 = por %p372, %p373
      %p375 = scmp.ne.s32.totalorder %s366, %s367
      %p376 = scmp.eq.s32.totalorder %s36, 0
      %p377 = por %p375, %p376
      %p378 = scmp.ne.s32.totalorder %s366, %s367
      %p379 = scmp.eq.s32.totalorder %s37, 1
      %p380 = por %p378, %p379
      %p382 = scmp.ne.s32.totalorder %s367, %s381
      %p383 = scmp.eq.s32.totalorder %s37, 0
      %p384 = por %p382, %p383
      %s386 = sadd.s32 %s385, 1
      %p389 = scmp.eq.s32.totalorder %s31, 1
      %p390 = scmp.ne.s32.totalorder %s385, %s387
      %p391 = scmp.eq.s32.totalorder %s31, 0
      %p392 = por %p390, %p391
      %p393 = scmp.ne.s32.totalorder %s385, %s387
      %p394 = scmp.eq.s32.totalorder %s36, 1
      %p395 = por %p393, %p394
      %p396 = scmp.ne.s32.totalorder %s387, %s388
      %p397 = scmp.eq.s32.totalorder %s36, 0
      %p398 = por %p396, %p397
      %p399 = scmp.ne.s32.totalorder %s387, %s388
      %p400 = scmp.eq.s32.totalorder %s37, 1
      %p401 = por %p399, %p400
      %p403 = scmp.ne.s32.totalorder %s388, %s402
      %p404 = scmp.eq.s32.totalorder %s37, 0
      %p405 = por %p403, %p404
      %s407 = sadd.s32 %s406, 1
      %p410 = scmp.eq.s32.totalorder %s31, 1
      %p411 = scmp.ne.s32.totalorder %s406, %s408
      %p412 = scmp.eq.s32.totalorder %s31, 0
      %p413 = por %p411, %p412
      %p414 = scmp.ne.s32.totalorder %s406, %s408
      %p415 = scmp.eq.s32.totalorder %s36, 1
      %p416 = por %p414, %p415
      %p417 = scmp.ne.s32.totalorder %s408, %s409
      %p418 = scmp.eq.s32.totalorder %s36, 0
      %p419 = por %p417, %p418
      %p420 = scmp.ne.s32.totalorder %s408, %s409
      %p421 = scmp.eq.s32.totalorder %s37, 1
      %p422 = por %p420, %p421
      %p424 = scmp.ne.s32.totalorder %s409, %s423
      %p425 = scmp.eq.s32.totalorder %s37, 0
      %p426 = por %p424, %p425
      %s427 = ssub.s32 %s31, %s38
      %p428 = scmp.eq.s32.totalorder %s427, 0
      %s430 = sadd.s32 %s429, 1
      %s431 = scalar_select %p428, %s429, %s430
      %p434 = pneg %p428
      %p435 = scmp.eq.s32.totalorder %s31, 1
      %p436 = por %p434, %p435
      %p437 = scmp.ne.s32.totalorder %s429, %s432
      %p438 = scmp.eq.s32.totalorder %s31, 0
      %p439 = por %p437, %p438
      %p440 = scmp.ne.s32.totalorder %s429, %s432
      %p441 = scmp.eq.s32.totalorder %s36, 1
      %p442 = por %p440, %p441
      %p443 = scmp.ne.s32.totalorder %s432, %s433
      %p444 = scmp.eq.s32.totalorder %s36, 0
      %p445 = por %p443, %p444
      %p446 = scmp.ne.s32.totalorder %s432, %s433
      %p447 = scmp.eq.s32.totalorder %s37, 1
      %p448 = por %p446, %p447
      %p450 = scmp.ne.s32.totalorder %s433, %s449
      %p451 = scmp.eq.s32.totalorder %s37, 0
      %p452 = por %p450, %p451
      %p453 = scmp.le.s32.totalorder 1, %s31
      %p454 = scmp.lt.s32.totalorder %s31, 3
      %p455 = pnand %p453, %p454
      %p456 = pneg %p455
      // Predicated region
      $region9: #{tpu_custom_call.1} parent=5 // pred_check
        _
      $region10: #{tpu_custom_call.1} parent=5 // pred_check_branch
        %458 = sbr.rel (%p455) target = $region12
      $region11: #{tpu_custom_call.1} parent=5 // pred_region
        %s459 = ssub.s32 %s31, 1
        // Predicated region
        $region13: #{tpu_custom_call.1} parent=11 // pred_check
          %p460 = pneg %p104
        $region14: #{tpu_custom_call.1} parent=11 // pred_check_branch
          %462 = sbr.rel (%p460) target = $region16
        $region15: #{tpu_custom_call.1} parent=11 // pred_region
          _
        $region16: #{tpu_custom_call.1} parent=11 // pred_fallthru
          _
        // Predicated region
        $region17: #{tpu_custom_call.1} parent=11 // pred_check
          %p463 = pneg %p125
        $region18: #{tpu_custom_call.1} parent=11 // pred_check_branch
          %465 = sbr.rel (%p463) target = $region20
        $region19: #{tpu_custom_call.1} parent=11 // pred_region
          _
        $region20: #{tpu_custom_call.1} parent=11 // pred_fallthru
          _
        // Predicated region
        $region21: #{tpu_custom_call.1} parent=11 // pred_check
          %p466 = pneg %p146
        $region22: #{tpu_custom_call.1} parent=11 // pred_check_branch
          %468 = sbr.rel (%p466) target = $region24
        $region23: #{tpu_custom_call.1} parent=11 // pred_region
          %s470 = ssub.s32 256, 256
          %471 = vsyncadd [#allocation4], %s470
          %s472 = sshll.u32 [#allocation3], 4
          %s473 = int_to_ptr.vmem [resolvable:$true] %s472
          %478 = dma.hbm_to_vmem [thread:$0]  %s4, 256, %s473, [#allocation4], 64, 64, 4
        $region24: #{tpu_custom_call.1} parent=11 // pred_fallthru
          _
        // Predicated region
        $region25: #{tpu_custom_call.1} parent=11 // pred_check
          %p479 = pneg %p167
        $region26: #{tpu_custom_call.1} parent=11 // pred_check_branch
          %481 = sbr.rel (%p479) target = $region28
        $region27: #{tpu_custom_call.1} parent=11 // pred_region
          %s483 = ssub.s32 256, 256
          %484 = vsyncadd [#allocation7], %s483
          %s485 = sshll.u32 [#allocation6], 4
          %s486 = int_to_ptr.vmem [resolvable:$true] %s485
          %491 = dma.hbm_to_vmem [thread:$0]  %s5, 256, %s486, [#allocation7], 64, 64, 4
        $region28: #{tpu_custom_call.1} parent=11 // pred_fallthru
          _
        // Predicated region
        $region29: #{tpu_custom_call.1} parent=11 // pred_check
          %p492 = pneg %p188
        $region30: #{tpu_custom_call.1} parent=11 // pred_check_branch
          %494 = sbr.rel (%p492) target = $region32
        $region31: #{tpu_custom_call.1} parent=11 // pred_region
          %s496 = ssub.s32 16, 16
          %497 = vsyncadd [#allocation7], %s496
          %s499 = sshll.u32 [#allocation8], 4
          %s500 = int_to_ptr.vmem [resolvable:$true] %s499
          %502 = dma.hbm_to_vmem [thread:$0]  %s6, 16, %s500, [#allocation7]
        $region32: #{tpu_custom_call.1} parent=11 // pred_fallthru
          _
        // Predicated region
        $region33: #{tpu_custom_call.1} parent=11 // pred_check
          %p503 = pneg %p209
        $region34: #{tpu_custom_call.1} parent=11 // pred_check_branch
          %505 = sbr.rel (%p503) target = $region36
        $region35: #{tpu_custom_call.1} parent=11 // pred_region
          %s507 = ssub.s32 16, 16
          %508 = vsyncadd [#allocation10], %s507
          %s510 = sshll.u32 [#allocation9], 4
          %s511 = int_to_ptr.vmem [resolvable:$true] %s510
          %513 = dma.hbm_to_vmem [thread:$0]  %s7, 16, %s511, [#allocation10]
        $region36: #{tpu_custom_call.1} parent=11 // pred_fallthru
          _
        // Predicated region
        $region37: #{tpu_custom_call.1} parent=11 // pred_check
          %p514 = pneg %p230
        $region38: #{tpu_custom_call.1} parent=11 // pred_check_branch
          %516 = sbr.rel (%p514) target = $region40
        $region39: #{tpu_custom_call.1} parent=11 // pred_region
          %s518 = ssub.s32 16, 16
          %519 = vsyncadd [#allocation10], %s518
          %s521 = sshll.u32 [#allocation11], 4
          %s522 = int_to_ptr.vmem [resolvable:$true] %s521
          %524 = dma.hbm_to_vmem [thread:$0]  %s8, 16, %s522, [#allocation10]
        $region40: #{tpu_custom_call.1} parent=11 // pred_fallthru
          _
        // Predicated region
        $region41: #{tpu_custom_call.1} parent=11 // pred_check
          %p525 = pneg %p251
        $region42: #{tpu_custom_call.1} parent=11 // pred_check_branch
          %527 = sbr.rel (%p525) target = $region44
        $region43: #{tpu_custom_call.1} parent=11 // pred_region
          %s529 = ssub.s32 16, 16
          %530 = vsyncadd [#allocation13], %s529
          %s532 = sshll.u32 [#allocation12], 4
          %s533 = int_to_ptr.vmem [resolvable:$true] %s532
          %535 = dma.hbm_to_vmem [thread:$0]  %s9, 16, %s533, [#allocation13]
        $region44: #{tpu_custom_call.1} parent=11 // pred_fallthru
          _
        // Predicated region
        $region45: #{tpu_custom_call.1} parent=11 // pred_check
          %p536 = pneg %p272
        $region46: #{tpu_custom_call.1} parent=11 // pred_check_branch
          %538 = sbr.rel (%p536) target = $region48
        $region47: #{tpu_custom_call.1} parent=11 // pred_region
          _
        $region48: #{tpu_custom_call.1} parent=11 // pred_fallthru
          _
        // Predicated region
        $region49: #{tpu_custom_call.1} parent=11 // pred_check
          %p539 = pneg %p293
        $region50: #{tpu_custom_call.1} parent=11 // pred_check_branch
          %541 = sbr.rel (%p539) target = $region52
        $region51: #{tpu_custom_call.1} parent=11 // pred_region
          _
        $region52: #{tpu_custom_call.1} parent=11 // pred_fallthru
          _
        // Predicated region
        $region53: #{tpu_custom_call.1} parent=11 // pred_check
          %p542 = pneg %p314
        $region54: #{tpu_custom_call.1} parent=11 // pred_check_branch
          %544 = sbr.rel (%p542) target = $region56
        $region55: #{tpu_custom_call.1} parent=11 // pred_region
          _
        $region56: #{tpu_custom_call.1} parent=11 // pred_fallthru
          _
        // Predicated region
        $region57: #{tpu_custom_call.1} parent=11 // pred_check
          %p545 = pneg %p335
        $region58: #{tpu_custom_call.1} parent=11 // pred_check_branch
          %547 = sbr.rel (%p545) target = $region60
        $region59: #{tpu_custom_call.1} parent=11 // pred_region
          _
        $region60: #{tpu_custom_call.1} parent=11 // pred_fallthru
          _
        // Predicated region
        $region61: #{tpu_custom_call.1} parent=11 // pred_check
          %p548 = pneg %p356
        $region62: #{tpu_custom_call.1} parent=11 // pred_check_branch
          %550 = sbr.rel (%p548) target = $region64
        $region63: #{tpu_custom_call.1} parent=11 // pred_region
          _
        $region64: #{tpu_custom_call.1} parent=11 // pred_fallthru
          _
        // Predicated region
        $region65: #{tpu_custom_call.1} parent=11 // pred_check
          %p551 = pneg %p377
        $region66: #{tpu_custom_call.1} parent=11 // pred_check_branch
          %553 = sbr.rel (%p551) target = $region68
        $region67: #{tpu_custom_call.1} parent=11 // pred_region
          _
        $region68: #{tpu_custom_call.1} parent=11 // pred_fallthru
          _
        // Predicated region
        $region69: #{tpu_custom_call.1} parent=11 // pred_check
          %p554 = pneg %p398
        $region70: #{tpu_custom_call.1} parent=11 // pred_check_branch
          %556 = sbr.rel (%p554) target = $region72
        $region71: #{tpu_custom_call.1} parent=11 // pred_region
          _
        $region72: #{tpu_custom_call.1} parent=11 // pred_fallthru
          _
        // Predicated region
        $region73: #{tpu_custom_call.1} parent=11 // pred_check
          %p557 = pneg %p419
        $region74: #{tpu_custom_call.1} parent=11 // pred_check_branch
          %559 = sbr.rel (%p557) target = $region76
        $region75: #{tpu_custom_call.1} parent=11 // pred_region
          _
        $region76: #{tpu_custom_call.1} parent=11 // pred_fallthru
          _
      $region12: #{tpu_custom_call.1} parent=5 // pred_fallthru
        _
      %p560 = scmp.lt.s32.totalorder %s31, 2
      // Predicated region
      $region77: #{tpu_custom_call.1} parent=5 // pred_check
        %p561 = pneg %p560
      $region78: #{tpu_custom_call.1} parent=5 // pred_check_branch
        %563 = sbr.rel (%p561) target = $region80
      $region79: #{tpu_custom_call.1} parent=5 // pred_region
        // Predicated region
        $region81: #{tpu_custom_call.1} parent=79 // pred_check
          %p564 = pneg %p51
        $region82: #{tpu_custom_call.1} parent=79 // pred_check_branch
          %566 = sbr.rel (%p564) target = $region84
        $region83: #{tpu_custom_call.1} parent=79 // pred_region
          %p567 = scmp.lt.s32.totalorder %s31, 1
          %s568 = scalar_select %p567, %s31, 1
          %s569 = smul.addr %s568, 8
          %s570 = scalar_lea.vmem %s0, %s569
        $region84: #{tpu_custom_call.1} parent=79 // pred_fallthru
          _
        // Predicated region
        $region85: #{tpu_custom_call.1} parent=79 // pred_check
          %p571 = pneg %p77
        $region86: #{tpu_custom_call.1} parent=79 // pred_check_branch
          %573 = sbr.rel (%p571) target = $region88
        $region87: #{tpu_custom_call.1} parent=79 // pred_region
          %p574 = scmp.lt.s32.totalorder %s31, 1
          %s575 = scalar_select %p574, %s31, 1
          %s576 = scalar_lea.vmem %s1, %s575
        $region88: #{tpu_custom_call.1} parent=79 // pred_fallthru
          _
      $region80: #{tpu_custom_call.1} parent=5 // pred_fallthru
        _
      %p577 = scmp.le.s32.totalorder 1, %s31
      %p578 = scmp.lt.s32.totalorder %s31, 3
      %p579 = pnand %p577, %p578
      %p580 = pneg %p579
      // Predicated region
      $region89: #{tpu_custom_call.1} parent=5 // pred_check
        _
      $region90: #{tpu_custom_call.1} parent=5 // pred_check_branch
        %582 = sbr.rel (%p579) target = $region92
      $region91: #{tpu_custom_call.1} parent=5 // pred_region
        %s583 = ssub.s32 %s31, 1
        // Predicated region
        $region93: #{tpu_custom_call.1} parent=91 // pred_check
          %p584 = pneg %p146
        $region94: #{tpu_custom_call.1} parent=91 // pred_check_branch
          %586 = sbr.rel (%p584) target = $region96
        $region95: #{tpu_custom_call.1} parent=91 // pred_region
          %587 = dma.done [#allocation4], 256
        $region96: #{tpu_custom_call.1} parent=91 // pred_fallthru
          _
        // Predicated region
        $region97: #{tpu_custom_call.1} parent=91 // pred_check
          %p588 = pneg %p167
        $region98: #{tpu_custom_call.1} parent=91 // pred_check_branch
          %590 = sbr.rel (%p588) target = $region100
        $region99: #{tpu_custom_call.1} parent=91 // pred_region
          %591 = dma.done [#allocation7], 256
        $region100: #{tpu_custom_call.1} parent=91 // pred_fallthru
          _
        // Predicated region
        $region101: #{tpu_custom_call.1} parent=91 // pred_check
          %p592 = pneg %p188
        $region102: #{tpu_custom_call.1} parent=91 // pred_check_branch
          %594 = sbr.rel (%p592) target = $region104
        $region103: #{tpu_custom_call.1} parent=91 // pred_region
          %595 = dma.done [#allocation7], 16
        $region104: #{tpu_custom_call.1} parent=91 // pred_fallthru
          _
        // Predicated region
        $region105: #{tpu_custom_call.1} parent=91 // pred_check
          %p596 = pneg %p209
        $region106: #{tpu_custom_call.1} parent=91 // pred_check_branch
          %598 = sbr.rel (%p596) target = $region108
        $region107: #{tpu_custom_call.1} parent=91 // pred_region
          %599 = dma.done [#allocation10], 16
        $region108: #{tpu_custom_call.1} parent=91 // pred_fallthru
          _
        // Predicated region
        $region109: #{tpu_custom_call.1} parent=91 // pred_check
          %p600 = pneg %p230
        $region110: #{tpu_custom_call.1} parent=91 // pred_check_branch
          %602 = sbr.rel (%p600) target = $region112
        $region111: #{tpu_custom_call.1} parent=91 // pred_region
          %603 = dma.done [#allocation10], 16
        $region112: #{tpu_custom_call.1} parent=91 // pred_fallthru
          _
        // Predicated region
        $region113: #{tpu_custom_call.1} parent=91 // pred_check
          %p604 = pneg %p251
        $region114: #{tpu_custom_call.1} parent=91 // pred_check_branch
          %606 = sbr.rel (%p604) target = $region116
        $region115: #{tpu_custom_call.1} parent=91 // pred_region
          %607 = dma.done [#allocation13], 16
        $region116: #{tpu_custom_call.1} parent=91 // pred_fallthru
          _
        %p608 = scmp.lt.s32.totalorder %s36, 1
        %s609 = scalar_select %p608, %s36, 1
        %s610 = smul.addr %s609, 8
        %s611 = scalar_lea.vmem %s0, %s610
        %p612 = pneg %p57
        %p613 = pneg %p54
        %p614 = scmp.lt.s32.totalorder %s36, 1
        %s615 = scalar_select %p614, %s36, 1
        %s616 = scalar_lea.vmem %s1, %s615
        %p617 = pneg %p83
        %p618 = pneg %p80
        %p619 = pneg %p104
        %p620 = pneg %p101
        %p621 = pneg %p125
        %p622 = pneg %p122
        %p623 = pneg %p146
        %p624 = pneg %p143
        %p625 = pneg %p167
        %p626 = pneg %p164
        %p627 = pneg %p188
        %p628 = pneg %p185
        %p629 = pneg %p209
        %p630 = pneg %p206
        %p631 = pneg %p230
        %p632 = pneg %p227
        %p633 = pneg %p251
        %p634 = pneg %p248
        %p635 = pneg %p272
        %p636 = pneg %p269
        %p637 = pneg %p293
        %p638 = pneg %p290
        %p639 = pneg %p314
        %p640 = pneg %p311
        %p641 = pneg %p335
        %p642 = pneg %p332
        %p643 = pneg %p356
        %p644 = pneg %p353
        %p645 = pneg %p377
        %p646 = pneg %p374
        %p647 = pneg %p398
        %p648 = pneg %p395
        %p649 = pneg %p419
        %p650 = pneg %p416
        %p651 = pneg %p445
        %p652 = pneg %p442
        %s653 = sand.u32 %s432, 1
        %s654 = scalar_lea.sflag [#allocation5], %s653
        %s655 = sand.u32 %s432, 1
        %s656 = smul.addr %s655, 8
        %s657 = scalar_lea.vmem [#allocation14], %s656
        %p658 = scmp.lt.s32.totalorder %s36, 1
        %s659 = scalar_select %p658, %s36, 1
        %s660 = smul.addr %s659, 8
        %s661 = scalar_lea.vmem %s0, %s660
        %p662 = scmp.lt.s32.totalorder %s36, 1
        %s663 = scalar_select %p662, %s36, 1
        %s664 = scalar_lea.vmem %s1, %s663
        %v666 = vld [vmem:[%s661] sm:$0xff]
        %v667 = vpack.c.bf16 %v666, %v666
        %v668 = vld [vmem:[%s2] sm:$0xf]
        %v669 = vld [vmem:[%s2 + $0x4] sm:$0xf]
        %v670 = vld [vmem:[%s2 + $0x8] sm:$0xf]
        %v671 = vld [vmem:[%s2 + $0xc] sm:$0xf]
        %v672 = vld [vmem:[#allocation8] sm:$0x1]
        %v674 = vlaneseq
        %v675 = vshrl.u32 %v674, 7
        %v676 = vsub.s32 0, %v675
        %v677 = vrot.slane %v672, %v676
        %v683 = vunpack.c.l.b16 %v668
        %v684 = vunpack.c.l.b16 %v669
        %v685 = vunpack.c.l.b16 %v670
        %v686 = vunpack.c.l.b16 %v671
        %v687 = vpack.c.b16 %v684, %v683
        %v688 = vpack.c.b16 %v686, %v685
        %vm691 = vcmask 261120
        %v693 = vsel %vm691, %v667, 0
        %695 = vmatprep.subr.bf16.mxu0 0
        %696 = vmatpush1.bf16.msra.mxu0 %v687
        %697 = vmatprep.subr.bf16.mxu0 0
        %698 = vmatpush1.bf16.msra.mxu0 %v688
        %699 = vmatprep.subr.bf16.mxu0 0
        %700 = vmatpush1.bf16.msra.mxu0 0
        %701 = vmatprep.subr.bf16.mxu0 0
        %702 = vmatpush1.bf16.msra.mxu0 0
        %703 = vmatprep.subr.bf16.mxu0 0
        %704 = vmatpush1.bf16.msra.mxu0 0
        %705 = vmatprep.subr.bf16.mxu0 0
        %706 = vmatpush1.bf16.msra.mxu0 0
        %707 = vmatprep.subr.bf16.mxu0 0
        %708 = vmatpush1.bf16.msra.mxu0 0
        %709 = vmatprep.subr.bf16.mxu0 0
        %710 = vmatpush1.bf16.msra.mxu0 0
        %711 = vmatprep.subr.bf16.mxu0 0
        %712 = vmatpush1.bf16.msra.mxu0 0
        %713 = vmatprep.subr.bf16.mxu0 0
        %714 = vmatpush1.bf16.msra.mxu0 0
        %715 = vmatprep.subr.bf16.mxu0 0
        %716 = vmatpush1.bf16.msra.mxu0 0
        %717 = vmatprep.subr.bf16.mxu0 0
        %718 = vmatpush1.bf16.msra.mxu0 0
        %719 = vmatprep.subr.bf16.mxu0 0
        %720 = vmatpush1.bf16.msra.mxu0 0
        %721 = vmatprep.subr.bf16.mxu0 0
        %722 = vmatpush1.bf16.msra.mxu0 0
        %723 = vmatprep.subr.bf16.mxu0 0
        %724 = vmatpush1.bf16.msra.mxu0 0
        %725 = vmatprep.subr.bf16.mxu0 0
        %726 = vmatpush1.bf16.msra.mxu0 0
        %727 = vmatprep.mubr.bf16.mxu0 0
        %728 = vmatmul.mubr.bf16.gmra.mrb[0].mxu0 %v693
        %v729 = vpop.f32.mrb[0].mxu0
        %v730 = vadd.f32 %v677, %v729
        %v731 = vpop.f32.mrb[0].mxu0
        %v732 = vpop.f32.mrb[0].mxu0
        %v733 = vpop.f32.mrb[0].mxu0
        %734 = vdwg.mxu0
        %v735 = vmul.f32 %v730, 0.35355338
        %v736 = vld [vmem:[%s3] sm:$0xf]
        %v737 = vld [vmem:[%s3 + $0x4] sm:$0xf]
        %v738 = vld [vmem:[%s3 + $0x8] sm:$0xf]
        %v739 = vld [vmem:[%s3 + $0xc] sm:$0xf]
        %v740 = vld [vmem:[#allocation9] sm:$0x1]
        %v742 = vlaneseq
        %v743 = vshrl.u32 %v742, 7
        %v744 = vsub.s32 0, %v743
        %v745 = vrot.slane %v740, %v744
        %v751 = vunpack.c.l.b16 %v736
        %v752 = vunpack.c.l.b16 %v737
        %v753 = vunpack.c.l.b16 %v738
        %v754 = vunpack.c.l.b16 %v739
        %v755 = vpack.c.b16 %v752, %v751
        %v756 = vpack.c.b16 %v754, %v753
        %759 = vmatprep.subr.bf16.mxu0 0
        %760 = vmatpush1.bf16.msra.mxu0 %v755
        %761 = vmatprep.subr.bf16.mxu0 0
        %762 = vmatpush1.bf16.msra.mxu0 %v756
        %763 = vmatprep.subr.bf16.mxu0 0
        %764 = vmatpush1.bf16.msra.mxu0 0
        %765 = vmatprep.subr.bf16.mxu0 0
        %766 = vmatpush1.bf16.msra.mxu0 0
        %767 = vmatprep.subr.bf16.mxu0 0
        %768 = vmatpush1.bf16.msra.mxu0 0
        %769 = vmatprep.subr.bf16.mxu0 0
        %770 = vmatpush1.bf16.msra.mxu0 0
        %771 = vmatprep.subr.bf16.mxu0 0
        %772 = vmatpush1.bf16.msra.mxu0 0
        %773 = vmatprep.subr.bf16.mxu0 0
        %774 = vmatpush1.bf16.msra.mxu0 0
        %775 = vmatprep.subr.bf16.mxu0 0
        %776 = vmatpush1.bf16.msra.mxu0 0
        %777 = vmatprep.subr.bf16.mxu0 0
        %778 = vmatpush1.bf16.msra.mxu0 0
        %779 = vmatprep.subr.bf16.mxu0 0
        %780 = vmatpush1.bf16.msra.mxu0 0
        %781 = vmatprep.subr.bf16.mxu0 0
        %782 = vmatpush1.bf16.msra.mxu0 0
        %783 = vmatprep.subr.bf16.mxu0 0
        %784 = vmatpush1.bf16.msra.mxu0 0
        %785 = vmatprep.subr.bf16.mxu0 0
        %786 = vmatpush1.bf16.msra.mxu0 0
        %787 = vmatprep.subr.bf16.mxu0 0
        %788 = vmatpush1.bf16.msra.mxu0 0
        %789 = vmatprep.subr.bf16.mxu0 0
        %790 = vmatpush1.bf16.msra.mxu0 0
        %791 = vmatprep.mubr.bf16.mxu0 0
        %792 = vmatmul.mubr.bf16.gmra.mrb[0].mxu0 %v693
        %v793 = vpop.f32.mrb[0].mxu0
        %v794 = vadd.f32 %v745, %v793
        %v795 = vpop.f32.mrb[0].mxu0
        %v796 = vpop.f32.mrb[0].mxu0
        %v797 = vpop.f32.mrb[0].mxu0
        %798 = vdwg.mxu0
        %v799 = vld [vmem:[#allocation3] sm:$0xf]
        %v800 = vld [vmem:[#allocation3 + $0x4] sm:$0xf]
        %v801 = vld [vmem:[#allocation3 + $0x8] sm:$0xf]
        %v802 = vld [vmem:[#allocation3 + $0xc] sm:$0xf]
        %v803 = vld [vmem:[#allocation11] sm:$0x1]
        %v805 = vlaneseq
        %v806 = vshrl.u32 %v805, 7
        %v807 = vsub.s32 0, %v806
        %v808 = vrot.slane %v803, %v807
        %v814 = vunpack.c.l.b16 %v799
        %v815 = vunpack.c.l.b16 %v800
        %v816 = vunpack.c.l.b16 %v801
        %v817 = vunpack.c.l.b16 %v802
        %v818 = vpack.c.b16 %v815, %v814
        %v819 = vpack.c.b16 %v817, %v816
        %822 = vmatprep.subr.bf16.mxu0 0
        %823 = vmatpush1.bf16.msra.mxu0 %v818
        %824 = vmatprep.subr.bf16.mxu0 0
        %825 = vmatpush1.bf16.msra.mxu0 %v819
        %826 = vmatprep.subr.bf16.mxu0 0
        %827 = vmatpush1.bf16.msra.mxu0 0
        %828 = vmatprep.subr.bf16.mxu0 0
        %829 = vmatpush1.bf16.msra.mxu0 0
        %830 = vmatprep.subr.bf16.mxu0 0
        %831 = vmatpush1.bf16.msra.mxu0 0
        %832 = vmatprep.subr.bf16.mxu0 0
        %833 = vmatpush1.bf16.msra.mxu0 0
        %834 = vmatprep.subr.bf16.mxu0 0
        %835 = vmatpush1.bf16.msra.mxu0 0
        %836 = vmatprep.subr.bf16.mxu0 0
        %837 = vmatpush1.bf16.msra.mxu0 0
        %838 = vmatprep.subr.bf16.mxu0 0
        %839 = vmatpush1.bf16.msra.mxu0 0
        %840 = vmatprep.subr.bf16.mxu0 0
        %841 = vmatpush1.bf16.msra.mxu0 0
        %842 = vmatprep.subr.bf16.mxu0 0
        %843 = vmatpush1.bf16.msra.mxu0 0
        %844 = vmatprep.subr.bf16.mxu0 0
        %845 = vmatpush1.bf16.msra.mxu0 0
        %846 = vmatprep.subr.bf16.mxu0 0
        %847 = vmatpush1.bf16.msra.mxu0 0
        %848 = vmatprep.subr.bf16.mxu0 0
        %849 = vmatpush1.bf16.msra.mxu0 0
        %850 = vmatprep.subr.bf16.mxu0 0
        %851 = vmatpush1.bf16.msra.mxu0 0
        %852 = vmatprep.subr.bf16.mxu0 0
        %853 = vmatpush1.bf16.msra.mxu0 0
        %854 = vmatprep.mubr.bf16.mxu0 0
        %855 = vmatmul.mubr.bf16.gmra.mrb[0].mxu0 %v693
        %v856 = vpop.f32.mrb[0].mxu0
        %v857 = vadd.f32 %v808, %v856
        %v858 = vpop.f32.mrb[0].mxu0
        %v859 = vpop.f32.mrb[0].mxu0
        %v860 = vpop.f32.mrb[0].mxu0
        %861 = vdwg.mxu0
        %v862 = vld [vmem:[%s664] sm:$0x1]
        %v863 = vpack.c.bf16 %v735, %v735
        %v864 = vpack.c.bf16 %v794, %v794
        %v865 = vpack.c.bf16 %v857, %v857
        %866 = vxpose.xlu0.c.b16.start [1/8] %v863, 128
        %867 = vxpose.xlu0.c.b16.cont [2/8] 0, 128
        %868 = vxpose.xlu0.c.b16.cont [3/8] 0, 128
        %869 = vxpose.xlu0.c.b16.cont [4/8] 0, 128
        %870 = vxpose.xlu0.c.b16.cont [5/8] 0, 128
        %871 = vxpose.xlu0.c.b16.cont [6/8] 0, 128
        %872 = vxpose.xlu0.c.b16.cont [7/8] 0, 128
        %873 = vxpose.xlu0.c.b16.end [8/8] 0, 128
        %v874 = vpop.trf.xlu0
        %v875 = vpop.trf.xlu0
        %v876 = vpop.trf.xlu0
        %v877 = vpop.trf.xlu0
        %v878 = vpop.trf.xlu0
        %v879 = vpop.trf.xlu0
        %v880 = vpop.trf.xlu0
        %v881 = vpop.trf.xlu0
        %v884 = vunpack.c.l.b16 %v874
        %v885 = vunpack.c.h.b16 %v874
        %v886 = vunpack.c.l.b16 %v875
        %v887 = vunpack.c.h.b16 %v875
        %v888 = vpack.c.b16 %v884, %v884
        %v889 = vpack.c.b16 %v885, %v885
        %v890 = vpack.c.b16 %v886, %v886
        %v891 = vpack.c.b16 %v887, %v887
        %896 = vxpose.xlu0.c.b16.start [1/8] %v864, 128
        %897 = vxpose.xlu0.c.b16.cont [2/8] 0, 128
        %898 = vxpose.xlu0.c.b16.cont [3/8] 0, 128
        %899 = vxpose.xlu0.c.b16.cont [4/8] 0, 128
        %900 = vxpose.xlu0.c.b16.cont [5/8] 0, 128
        %901 = vxpose.xlu0.c.b16.cont [6/8] 0, 128
        %902 = vxpose.xlu0.c.b16.cont [7/8] 0, 128
        %903 = vxpose.xlu0.c.b16.end [8/8] 0, 128
        %v904 = vpop.trf.xlu0
        %v905 = vpop.trf.xlu0
        %v906 = vpop.trf.xlu0
        %v907 = vpop.trf.xlu0
        %v908 = vpop.trf.xlu0
        %v909 = vpop.trf.xlu0
        %v910 = vpop.trf.xlu0
        %v911 = vpop.trf.xlu0
        %v914 = vunpack.c.l.b16 %v904
        %v915 = vunpack.c.h.b16 %v904
        %v916 = vunpack.c.l.b16 %v905
        %v917 = vunpack.c.h.b16 %v905
        %v918 = vpack.c.b16 %v914, %v914
        %v919 = vpack.c.b16 %v915, %v915
        %v920 = vpack.c.b16 %v916, %v916
        %v921 = vpack.c.b16 %v917, %v917
        %922 = vxpose.xlu0.c.b16.start [1/8] %v865, 128
        %923 = vxpose.xlu0.c.b16.cont [2/8] 0, 128
        %924 = vxpose.xlu0.c.b16.cont [3/8] 0, 128
        %925 = vxpose.xlu0.c.b16.cont [4/8] 0, 128
        %926 = vxpose.xlu0.c.b16.cont [5/8] 0, 128
        %927 = vxpose.xlu0.c.b16.cont [6/8] 0, 128
        %928 = vxpose.xlu0.c.b16.cont [7/8] 0, 128
        %929 = vxpose.xlu0.c.b16.end [8/8] 0, 128
        %v930 = vpop.trf.xlu0
        %v931 = vpop.trf.xlu0
        %v932 = vpop.trf.xlu0
        %v933 = vpop.trf.xlu0
        %v934 = vpop.trf.xlu0
        %v935 = vpop.trf.xlu0
        %v936 = vpop.trf.xlu0
        %v937 = vpop.trf.xlu0
        %v940 = vunpack.c.l.b16 %v930
        %v941 = vunpack.c.h.b16 %v930
        %v942 = vunpack.c.l.b16 %v931
        %v943 = vunpack.c.h.b16 %v931
        %v944 = vpack.c.b16 %v940, %v940
        %v945 = vpack.c.b16 %v941, %v941
        %v946 = vpack.c.b16 %v942, %v942
        %v947 = vpack.c.b16 %v943, %v943
        %v949 = vlaneseq
        %v950 = vshrl.u32 %v949, 7
        %v951 = vsub.s32 0, %v950
        %v952 = vrot.slane %v862, %v951
        %954 = vxpose.xlu0.c.b16.start [1/8] %v888, 128
        %955 = vxpose.xlu0.c.b16.cont [2/8] 0, 128
        %956 = vxpose.xlu0.c.b16.cont [3/8] 0, 128
        %957 = vxpose.xlu0.c.b16.cont [4/8] 0, 128
        %958 = vxpose.xlu0.c.b16.cont [5/8] 0, 128
        %959 = vxpose.xlu0.c.b16.cont [6/8] 0, 128
        %960 = vxpose.xlu0.c.b16.cont [7/8] 0, 128
        %961 = vxpose.xlu0.c.b16.end [8/8] 0, 128
        %v962 = vpop.trf.xlu0
        %v963 = vpop.trf.xlu0
        %v964 = vpop.trf.xlu0
        %v965 = vpop.trf.xlu0
        %v966 = vpop.trf.xlu0
        %v967 = vpop.trf.xlu0
        %v968 = vpop.trf.xlu0
        %v969 = vpop.trf.xlu0
        %vm970 = vcmask 64512
        %v972 = vsel %vm970, %v962, 0
        %vm974 = vcmask 1043456
        %v976 = vsel %vm974, %v918, 0
        %978 = vmatprep.subr.bf16.mxu0 0
        %979 = vmatpush1.bf16.msra.mxu0 %v976
        %980 = vmatprep.subr.bf16.mxu0 0
        %981 = vmatpush1.bf16.msra.mxu0 0
        %982 = vmatprep.subr.bf16.mxu0 0
        %983 = vmatpush1.bf16.msra.mxu0 0
        %984 = vmatprep.subr.bf16.mxu0 0
        %985 = vmatpush1.bf16.msra.mxu0 0
        %986 = vmatprep.subr.bf16.mxu0 0
        %987 = vmatpush1.bf16.msra.mxu0 0
        %988 = vmatprep.subr.bf16.mxu0 0
        %989 = vmatpush1.bf16.msra.mxu0 0
        %990 = vmatprep.subr.bf16.mxu0 0
        %991 = vmatpush1.bf16.msra.mxu0 0
        %992 = vmatprep.subr.bf16.mxu0 0
        %993 = vmatpush1.bf16.msra.mxu0 0
        %994 = vmatprep.subr.bf16.mxu0 0
        %995 = vmatpush1.bf16.msra.mxu0 0
        %996 = vmatprep.subr.bf16.mxu0 0
        %997 = vmatpush1.bf16.msra.mxu0 0
        %998 = vmatprep.subr.bf16.mxu0 0
        %999 = vmatpush1.bf16.msra.mxu0 0
        %1000 = vmatprep.subr.bf16.mxu0 0
        %1001 = vmatpush1.bf16.msra.mxu0 0
        %1002 = vmatprep.subr.bf16.mxu0 0
        %1003 = vmatpush1.bf16.msra.mxu0 0
        %1004 = vmatprep.subr.bf16.mxu0 0
        %1005 = vmatpush1.bf16.msra.mxu0 0
        %1006 = vmatprep.subr.bf16.mxu0 0
        %1007 = vmatpush1.bf16.msra.mxu0 0
        %1008 = vmatprep.subr.bf16.mxu0 0
        %1009 = vmatpush1.bf16.msra.mxu0 0
        %1010 = vmatprep.mubr.bf16.mxu0 0
        %1011 = vmatmul.mubr.bf16.gmra.mrb[0].mxu0 %v972
        %v1012 = vpop.f32.mrb[0].mxu0
        %v1013 = vadd.f32 %v952, %v1012
        %v1014 = vpop.f32.mrb[0].mxu0
        %v1015 = vpop.f32.mrb[0].mxu0
        %v1016 = vpop.f32.mrb[0].mxu0
        %1017 = vdwg.mxu0
        %1018 = vxpose.xlu0.c.b16.start [1/8] %v889, 128
        %1019 = vxpose.xlu0.c.b16.cont [2/8] 0, 128
        %1020 = vxpose.xlu0.c.b16.cont [3/8] 0, 128
        %1021 = vxpose.xlu0.c.b16.cont [4/8] 0, 128
        %1022 = vxpose.xlu0.c.b16.cont [5/8] 0, 128
        %1023 = vxpose.xlu0.c.b16.cont [6/8] 0, 128
        %1024 = vxpose.xlu0.c.b16.cont [7/8] 0, 128
        %1025 = vxpose.xlu0.c.b16.end [8/8] 0, 128
        %v1026 = vpop.trf.xlu0
        %v1027 = vpop.trf.xlu0
        %v1028 = vpop.trf.xlu0
        %v1029 = vpop.trf.xlu0
        %v1030 = vpop.trf.xlu0
        %v1031 = vpop.trf.xlu0
        %v1032 = vpop.trf.xlu0
        %v1033 = vpop.trf.xlu0
        %v1035 = vsel %vm970, %v1026, 0
        %v1038 = vsel %vm974, %v919, 0
        %1040 = vmatprep.subr.bf16.mxu0 0
        %1041 = vmatpush1.bf16.msra.mxu0 %v1038
        %1042 = vmatprep.subr.bf16.mxu0 0
        %1043 = vmatpush1.bf16.msra.mxu0 0
        %1044 = vmatprep.subr.bf16.mxu0 0
        %1045 = vmatpush1.bf16.msra.mxu0 0
        %1046 = vmatprep.subr.bf16.mxu0 0
        %1047 = vmatpush1.bf16.msra.mxu0 0
        %1048 = vmatprep.subr.bf16.mxu0 0
        %1049 = vmatpush1.bf16.msra.mxu0 0
        %1050 = vmatprep.subr.bf16.mxu0 0
        %1051 = vmatpush1.bf16.msra.mxu0 0
        %1052 = vmatprep.subr.bf16.mxu0 0
        %1053 = vmatpush1.bf16.msra.mxu0 0
        %1054 = vmatprep.subr.bf16.mxu0 0
        %1055 = vmatpush1.bf16.msra.mxu0 0
        %1056 = vmatprep.subr.bf16.mxu0 0
        %1057 = vmatpush1.bf16.msra.mxu0 0
        %1058 = vmatprep.subr.bf16.mxu0 0
        %1059 = vmatpush1.bf16.msra.mxu0 0
        %1060 = vmatprep.subr.bf16.mxu0 0
        %1061 = vmatpush1.bf16.msra.mxu0 0
        %1062 = vmatprep.subr.bf16.mxu0 0
        %1063 = vmatpush1.bf16.msra.mxu0 0
        %1064 = vmatprep.subr.bf16.mxu0 0
        %1065 = vmatpush1.bf16.msra.mxu0 0
        %1066 = vmatprep.subr.bf16.mxu0 0
        %1067 = vmatpush1.bf16.msra.mxu0 0
        %1068 = vmatprep.subr.bf16.mxu0 0
        %1069 = vmatpush1.bf16.msra.mxu0 0
        %1070 = vmatprep.subr.bf16.mxu0 0
        %1071 = vmatpush1.bf16.msra.mxu0 0
        %1072 = vmatprep.mubr.bf16.mxu0 0
        %1073 = vmatmul.mubr.bf16.gmra.mrb[0].mxu0 %v1035
        %v1074 = vpop.f32.mrb[0].mxu0
        %v1075 = vadd.f32 %v952, %v1074
        %v1076 = vpop.f32.mrb[0].mxu0
        %v1077 = vpop.f32.mrb[0].mxu0
        %v1078 = vpop.f32.mrb[0].mxu0
        %1079 = vdwg.mxu0
        %1080 = vxpose.xlu0.c.b16.start [1/8] %v890, 128
        %1081 = vxpose.xlu0.c.b16.cont [2/8] 0, 128
        %1082 = vxpose.xlu0.c.b16.cont [3/8] 0, 128
        %1083 = vxpose.xlu0.c.b16.cont [4/8] 0, 128
        %1084 = vxpose.xlu0.c.b16.cont [5/8] 0, 128
        %1085 = vxpose.xlu0.c.b16.cont [6/8] 0, 128
        %1086 = vxpose.xlu0.c.b16.cont [7/8] 0, 128
        %1087 = vxpose.xlu0.c.b16.end [8/8] 0, 128
        %v1088 = vpop.trf.xlu0
        %v1089 = vpop.trf.xlu0
        %v1090 = vpop.trf.xlu0
        %v1091 = vpop.trf.xlu0
        %v1092 = vpop.trf.xlu0
        %v1093 = vpop.trf.xlu0
        %v1094 = vpop.trf.xlu0
        %v1095 = vpop.trf.xlu0
        %v1097 = vsel %vm970, %v1088, 0
        %v1100 = vsel %vm974, %v920, 0
        %1102 = vmatprep.subr.bf16.mxu0 0
        %1103 = vmatpush1.bf16.msra.mxu0 %v1100
        %1104 = vmatprep.subr.bf16.mxu0 0
        %1105 = vmatpush1.bf16.msra.mxu0 0
        %1106 = vmatprep.subr.bf16.mxu0 0
        %1107 = vmatpush1.bf16.msra.mxu0 0
        %1108 = vmatprep.subr.bf16.mxu0 0
        %1109 = vmatpush1.bf16.msra.mxu0 0
        %1110 = vmatprep.subr.bf16.mxu0 0
        %1111 = vmatpush1.bf16.msra.mxu0 0
        %1112 = vmatprep.subr.bf16.mxu0 0
        %1113 = vmatpush1.bf16.msra.mxu0 0
        %1114 = vmatprep.subr.bf16.mxu0 0
        %1115 = vmatpush1.bf16.msra.mxu0 0
        %1116 = vmatprep.subr.bf16.mxu0 0
        %1117 = vmatpush1.bf16.msra.mxu0 0
        %1118 = vmatprep.subr.bf16.mxu0 0
        %1119 = vmatpush1.bf16.msra.mxu0 0
        %1120 = vmatprep.subr.bf16.mxu0 0
        %1121 = vmatpush1.bf16.msra.mxu0 0
        %1122 = vmatprep.subr.bf16.mxu0 0
        %1123 = vmatpush1.bf16.msra.mxu0 0
        %1124 = vmatprep.subr.bf16.mxu0 0
        %1125 = vmatpush1.bf16.msra.mxu0 0
        %1126 = vmatprep.subr.bf16.mxu0 0
        %1127 = vmatpush1.bf16.msra.mxu0 0
        %1128 = vmatprep.subr.bf16.mxu0 0
        %1129 = vmatpush1.bf16.msra.mxu0 0
        %1130 = vmatprep.subr.bf16.mxu0 0
        %1131 = vmatpush1.bf16.msra.mxu0 0
        %1132 = vmatprep.subr.bf16.mxu0 0
        %1133 = vmatpush1.bf16.msra.mxu0 0
        %1134 = vmatprep.mubr.bf16.mxu0 0
        %1135 = vmatmul.mubr.bf16.gmra.mrb[0].mxu0 %v1097
        %v1136 = vpop.f32.mrb[0].mxu0
        %v1137 = vadd.f32 %v952, %v1136
        %v1138 = vpop.f32.mrb[0].mxu0
        %v1139 = vpop.f32.mrb[0].mxu0
        %v1140 = vpop.f32.mrb[0].mxu0
        %1141 = vdwg.mxu0
        %1142 = vxpose.xlu0.c.b16.start [1/8] %v891, 128
        %1143 = vxpose.xlu0.c.b16.cont [2/8] 0, 128
        %1144 = vxpose.xlu0.c.b16.cont [3/8] 0, 128
        %1145 = vxpose.xlu0.c.b16.cont [4/8] 0, 128
        %1146 = vxpose.xlu0.c.b16.cont [5/8] 0, 128
        %1147 = vxpose.xlu0.c.b16.cont [6/8] 0, 128
        %1148 = vxpose.xlu0.c.b16.cont [7/8] 0, 128
        %1149 = vxpose.xlu0.c.b16.end [8/8] 0, 128
        %v1150 = vpop.trf.xlu0
        %v1151 = vpop.trf.xlu0
        %v1152 = vpop.trf.xlu0
        %v1153 = vpop.trf.xlu0
        %v1154 = vpop.trf.xlu0
        %v1155 = vpop.trf.xlu0
        %v1156 = vpop.trf.xlu0
        %v1157 = vpop.trf.xlu0
        %v1159 = vsel %vm970, %v1150, 0
        %v1162 = vsel %vm974, %v921, 0
        %1164 = vmatprep.subr.bf16.mxu0 0
        %1165 = vmatpush1.bf16.msra.mxu0 %v1162
        %1166 = vmatprep.subr.bf16.mxu0 0
        %1167 = vmatpush1.bf16.msra.mxu0 0
        %1168 = vmatprep.subr.bf16.mxu0 0
        %1169 = vmatpush1.bf16.msra.mxu0 0
        %1170 = vmatprep.subr.bf16.mxu0 0
        %1171 = vmatpush1.bf16.msra.mxu0 0
        %1172 = vmatprep.subr.bf16.mxu0 0
        %1173 = vmatpush1.bf16.msra.mxu0 0
        %1174 = vmatprep.subr.bf16.mxu0 0
        %1175 = vmatpush1.bf16.msra.mxu0 0
        %1176 = vmatprep.subr.bf16.mxu0 0
        %1177 = vmatpush1.bf16.msra.mxu0 0
        %1178 = vmatprep.subr.bf16.mxu0 0
        %1179 = vmatpush1.bf16.msra.mxu0 0
        %1180 = vmatprep.subr.bf16.mxu0 0
        %1181 = vmatpush1.bf16.msra.mxu0 0
        %1182 = vmatprep.subr.bf16.mxu0 0
        %1183 = vmatpush1.bf16.msra.mxu0 0
        %1184 = vmatprep.subr.bf16.mxu0 0
        %1185 = vmatpush1.bf16.msra.mxu0 0
        %1186 = vmatprep.subr.bf16.mxu0 0
        %1187 = vmatpush1.bf16.msra.mxu0 0
        %1188 = vmatprep.subr.bf16.mxu0 0
        %1189 = vmatpush1.bf16.msra.mxu0 0
        %1190 = vmatprep.subr.bf16.mxu0 0
        %1191 = vmatpush1.bf16.msra.mxu0 0
        %1192 = vmatprep.subr.bf16.mxu0 0
        %1193 = vmatpush1.bf16.msra.mxu0 0
        %1194 = vmatprep.subr.bf16.mxu0 0
        %1195 = vmatpush1.bf16.msra.mxu0 0
        %1196 = vmatprep.mubr.bf16.mxu0 0
        %1197 = vmatmul.mubr.bf16.gmra.mrb[0].mxu0 %v1159
        %v1198 = vpop.f32.mrb[0].mxu0
        %v1199 = vadd.f32 %v952, %v1198
        %v1200 = vpop.f32.mrb[0].mxu0
        %v1201 = vpop.f32.mrb[0].mxu0
        %v1202 = vpop.f32.mrb[0].mxu0
        %1203 = vdwg.mxu0
        %v1204 = vsel %vm970, %v1013, -inf
        %1205 = vmax.xlane.f32.xlu0 %v1204
        %v1206 = vpop.xlane.xlu0 %1205
        %v1207 = vsel %vm970, %v1075, -inf
        %1208 = vmax.xlane.f32.xlu0 %v1207
        %v1209 = vpop.xlane.xlu0 %1208
        %v1210 = vsel %vm970, %v1137, -inf
        %1211 = vmax.xlane.f32.xlu0 %v1210
        %v1212 = vpop.xlane.xlu0 %1211
        %v1213 = vsel %vm970, %v1199, -inf
        %1214 = vmax.xlane.f32.xlu0 %v1213
        %v1215 = vpop.xlane.xlu0 %1214
        %v1216 = vsub.f32 %v1013, %v1206
        %v1217 = vsub.f32 %v1075, %v1209
        %v1218 = vsub.f32 %v1137, %v1212
        %v1219 = vsub.f32 %v1199, %v1215
        %v1220 = vmul.f32 %v1216, 1.442695
        %v1221 = vpow.pop %v1220
        %v1222 = vmul.f32 %v1217, 1.442695
        %v1223 = vpow.pop %v1222
        %v1224 = vmul.f32 %v1218, 1.442695
        %v1225 = vpow.pop %v1224
        %v1226 = vmul.f32 %v1219, 1.442695
        %v1227 = vpow.pop %v1226
        %v1228 = vsel %vm970, %v1221, 0.0
        %1229 = vadd.xlane.f32.xlu0 %v1228
        %v1230 = vpop.xlane.xlu0 %1229
        %v1231 = vsel %vm970, %v1223, 0.0
        %1232 = vadd.xlane.f32.xlu0 %v1231
        %v1233 = vpop.xlane.xlu0 %1232
        %v1234 = vsel %vm970, %v1225, 0.0
        %1235 = vadd.xlane.f32.xlu0 %v1234
        %v1236 = vpop.xlane.xlu0 %1235
        %v1237 = vsel %vm970, %v1227, 0.0
        %1238 = vadd.xlane.f32.xlu0 %v1237
        %v1239 = vpop.xlane.xlu0 %1238
        %v1240 = vpack.c.bf16 %v1221, %v1221
        %v1241 = vpack.c.bf16 %v1223, %v1223
        %v1242 = vpack.c.bf16 %v1225, %v1225
        %v1243 = vpack.c.bf16 %v1227, %v1227
        %v1245 = vsel %vm970, %v944, 0
        %v1248 = vsel %vm970, %v1240, 0
        %1250 = vmatprep.subr.bf16.mxu0 0
        %1251 = vmatpush1.bf16.xpose.msra.mxu0 %v1248
        %1252 = vmatprep.subr.bf16.mxu0 0
        %1253 = vmatpush1.bf16.xpose.msra.mxu0 0
        %1254 = vmatprep.subr.bf16.mxu0 0
        %1255 = vmatpush1.bf16.xpose.msra.mxu0 0
        %1256 = vmatprep.subr.bf16.mxu0 0
        %1257 = vmatpush1.bf16.xpose.msra.mxu0 0
        %1258 = vmatprep.subr.bf16.mxu0 0
        %1259 = vmatpush1.bf16.xpose.msra.mxu0 0
        %1260 = vmatprep.subr.bf16.mxu0 0
        %1261 = vmatpush1.bf16.xpose.msra.mxu0 0
        %1262 = vmatprep.subr.bf16.mxu0 0
        %1263 = vmatpush1.bf16.xpose.msra.mxu0 0
        %1264 = vmatprep.subr.bf16.mxu0 0
        %1265 = vmatpush1.bf16.xpose.msra.mxu0 0
        %1266 = vmatprep.subr.bf16.mxu0 0
        %1267 = vmatpush1.bf16.xpose.msra.mxu0 0
        %1268 = vmatprep.subr.bf16.mxu0 0
        %1269 = vmatpush1.bf16.xpose.msra.mxu0 0
        %1270 = vmatprep.subr.bf16.mxu0 0
        %1271 = vmatpush1.bf16.xpose.msra.mxu0 0
        %1272 = vmatprep.subr.bf16.mxu0 0
        %1273 = vmatpush1.bf16.xpose.msra.mxu0 0
        %1274 = vmatprep.subr.bf16.mxu0 0
        %1275 = vmatpush1.bf16.xpose.msra.mxu0 0
        %1276 = vmatprep.subr.bf16.mxu0 0
        %1277 = vmatpush1.bf16.xpose.msra.mxu0 0
        %1278 = vmatprep.subr.bf16.mxu0 0
        %1279 = vmatpush1.bf16.xpose.msra.mxu0 0
        %1280 = vmatprep.subr.bf16.mxu0 0
        %1281 = vmatpush1.bf16.xpose.msra.mxu0 0
        %1282 = vmatprep.mubr.bf16.mxu0 0
        %1283 = vmatmul.mubr.bf16.gmra.mrb[0].mxu0 %v1245
        %v1284 = vpop.f32.mrb[0].mxu0
        %v1285 = vadd.f32 0.0, %v1284
        %v1286 = vpop.f32.mrb[0].mxu0
        %v1287 = vpop.f32.mrb[0].mxu0
        %v1288 = vpop.f32.mrb[0].mxu0
        %1289 = vdwg.mxu0
        %v1291 = vsel %vm970, %v945, 0
        %v1294 = vsel %vm970, %v1241, 0
        %1296 = vmatprep.subr.bf16.mxu0 0
        %1297 = vmatpush1.bf16.xpose.msra.mxu0 %v1294
        %1298 = vmatprep.subr.bf16.mxu0 0
        %1299 = vmatpush1.bf16.xpose.msra.mxu0 0
        %1300 = vmatprep.subr.bf16.mxu0 0
        %1301 = vmatpush1.bf16.xpose.msra.mxu0 0
        %1302 = vmatprep.subr.bf16.mxu0 0
        %1303 = vmatpush1.bf16.xpose.msra.mxu0 0
        %1304 = vmatprep.subr.bf16.mxu0 0
        %1305 = vmatpush1.bf16.xpose.msra.mxu0 0
        %1306 = vmatprep.subr.bf16.mxu0 0
        %1307 = vmatpush1.bf16.xpose.msra.mxu0 0
        %1308 = vmatprep.subr.bf16.mxu0 0
        %1309 = vmatpush1.bf16.xpose.msra.mxu0 0
        %1310 = vmatprep.subr.bf16.mxu0 0
        %1311 = vmatpush1.bf16.xpose.msra.mxu0 0
        %1312 = vmatprep.subr.bf16.mxu0 0
        %1313 = vmatpush1.bf16.xpose.msra.mxu0 0
        %1314 = vmatprep.subr.bf16.mxu0 0
        %1315 = vmatpush1.bf16.xpose.msra.mxu0 0
        %1316 = vmatprep.subr.bf16.mxu0 0
        %1317 = vmatpush1.bf16.xpose.msra.mxu0 0
        %1318 = vmatprep.subr.bf16.mxu0 0
        %1319 = vmatpush1.bf16.xpose.msra.mxu0 0
        %1320 = vmatprep.subr.bf16.mxu0 0
        %1321 = vmatpush1.bf16.xpose.msra.mxu0 0
        %1322 = vmatprep.subr.bf16.mxu0 0
        %1323 = vmatpush1.bf16.xpose.msra.mxu0 0
        %1324 = vmatprep.subr.bf16.mxu0 0
        %1325 = vmatpush1.bf16.xpose.msra.mxu0 0
        %1326 = vmatprep.subr.bf16.mxu0 0
        %1327 = vmatpush1.bf16.xpose.msra.mxu0 0
        %1328 = vmatprep.mubr.bf16.mxu0 0
        %1329 = vmatmul.mubr.bf16.gmra.mrb[0].mxu0 %v1291
        %v1330 = vpop.f32.mrb[0].mxu0
        %v1331 = vadd.f32 0.0, %v1330
        %v1332 = vpop.f32.mrb[0].mxu0
        %v1333 = vpop.f32.mrb[0].mxu0
        %v1334 = vpop.f32.mrb[0].mxu0
        %1335 = vdwg.mxu0
        %v1337 = vsel %vm970, %v946, 0
        %v1340 = vsel %vm970, %v1242, 0
        %1342 = vmatprep.subr.bf16.mxu0 0
        %1343 = vmatpush1.bf16.xpose.msra.mxu0 %v1340
        %1344 = vmatprep.subr.bf16.mxu0 0
        %1345 = vmatpush1.bf16.xpose.msra.mxu0 0
        %1346 = vmatprep.subr.bf16.mxu0 0
        %1347 = vmatpush1.bf16.xpose.msra.mxu0 0
        %1348 = vmatprep.subr.bf16.mxu0 0
        %1349 = vmatpush1.bf16.xpose.msra.mxu0 0
        %1350 = vmatprep.subr.bf16.mxu0 0
        %1351 = vmatpush1.bf16.xpose.msra.mxu0 0
        %1352 = vmatprep.subr.bf16.mxu0 0
        %1353 = vmatpush1.bf16.xpose.msra.mxu0 0
        %1354 = vmatprep.subr.bf16.mxu0 0
        %1355 = vmatpush1.bf16.xpose.msra.mxu0 0
        %1356 = vmatprep.subr.bf16.mxu0 0
        %1357 = vmatpush1.bf16.xpose.msra.mxu0 0
        %1358 = vmatprep.subr.bf16.mxu0 0
        %1359 = vmatpush1.bf16.xpose.msra.mxu0 0
        %1360 = vmatprep.subr.bf16.mxu0 0
        %1361 = vmatpush1.bf16.xpose.msra.mxu0 0
        %1362 = vmatprep.subr.bf16.mxu0 0
        %1363 = vmatpush1.bf16.xpose.msra.mxu0 0
        %1364 = vmatprep.subr.bf16.mxu0 0
        %1365 = vmatpush1.bf16.xpose.msra.mxu0 0
        %1366 = vmatprep.subr.bf16.mxu0 0
        %1367 = vmatpush1.bf16.xpose.msra.mxu0 0
        %1368 = vmatprep.subr.bf16.mxu0 0
        %1369 = vmatpush1.bf16.xpose.msra.mxu0 0
        %1370 = vmatprep.subr.bf16.mxu0 0
        %1371 = vmatpush1.bf16.xpose.msra.mxu0 0
        %1372 = vmatprep.subr.bf16.mxu0 0
        %1373 = vmatpush1.bf16.xpose.msra.mxu0 0
        %1374 = vmatprep.mubr.bf16.mxu0 0
        %1375 = vmatmul.mubr.bf16.gmra.mrb[0].mxu0 %v1337
        %v1376 = vpop.f32.mrb[0].mxu0
        %v1377 = vadd.f32 0.0, %v1376
        %v1378 = vpop.f32.mrb[0].mxu0
        %v1379 = vpop.f32.mrb[0].mxu0
        %v1380 = vpop.f32.mrb[0].mxu0
        %1381 = vdwg.mxu0
        %v1383 = vsel %vm970, %v947, 0
        %v1386 = vsel %vm970, %v1243, 0
        %1388 = vmatprep.subr.bf16.mxu0 0
        %1389 = vmatpush1.bf16.xpose.msra.mxu0 %v1386
        %1390 = vmatprep.subr.bf16.mxu0 0
        %1391 = vmatpush1.bf16.xpose.msra.mxu0 0
        %1392 = vmatprep.subr.bf16.mxu0 0
        %1393 = vmatpush1.bf16.xpose.msra.mxu0 0
        %1394 = vmatprep.subr.bf16.mxu0 0
        %1395 = vmatpush1.bf16.xpose.msra.mxu0 0
        %1396 = vmatprep.subr.bf16.mxu0 0
        %1397 = vmatpush1.bf16.xpose.msra.mxu0 0
        %1398 = vmatprep.subr.bf16.mxu0 0
        %1399 = vmatpush1.bf16.xpose.msra.mxu0 0
        %1400 = vmatprep.subr.bf16.mxu0 0
        %1401 = vmatpush1.bf16.xpose.msra.mxu0 0
        %1402 = vmatprep.subr.bf16.mxu0 0
        %1403 = vmatpush1.bf16.xpose.msra.mxu0 0
        %1404 = vmatprep.subr.bf16.mxu0 0
        %1405 = vmatpush1.bf16.xpose.msra.mxu0 0
        %1406 = vmatprep.subr.bf16.mxu0 0
        %1407 = vmatpush1.bf16.xpose.msra.mxu0 0
        %1408 = vmatprep.subr.bf16.mxu0 0
        %1409 = vmatpush1.bf16.xpose.msra.mxu0 0
        %1410 = vmatprep.subr.bf16.mxu0 0
        %1411 = vmatpush1.bf16.xpose.msra.mxu0 0
        %1412 = vmatprep.subr.bf16.mxu0 0
        %1413 = vmatpush1.bf16.xpose.msra.mxu0 0
        %1414 = vmatprep.subr.bf16.mxu0 0
        %1415 = vmatpush1.bf16.xpose.msra.mxu0 0
        %1416 = vmatprep.subr.bf16.mxu0 0
        %1417 = vmatpush1.bf16.xpose.msra.mxu0 0
        %1418 = vmatprep.subr.bf16.mxu0 0
        %1419 = vmatpush1.bf16.xpose.msra.mxu0 0
        %1420 = vmatprep.mubr.bf16.mxu0 0
        %1421 = vmatmul.mubr.bf16.gmra.mrb[0].mxu0 %v1383
        %v1422 = vpop.f32.mrb[0].mxu0
        %v1423 = vadd.f32 0.0, %v1422
        %v1424 = vpop.f32.mrb[0].mxu0
        %v1425 = vpop.f32.mrb[0].mxu0
        %v1426 = vpop.f32.mrb[0].mxu0
        %1427 = vdwg.mxu0
        %v1428 = vrcp.pop %v1230
        %v1429 = vrcp.pop %v1233
        %v1430 = vrcp.pop %v1236
        %v1431 = vrcp.pop %v1239
        %1432 = vxpose.xlu0.b32.start [1/16] %v1428, 128
        %1433 = vxpose.xlu0.b32.cont [2/16] 0.0, 128
        %1434 = vxpose.xlu0.b32.cont [3/16] 0.0, 128
        %1435 = vxpose.xlu0.b32.cont [4/16] 0.0, 128
        %1436 = vxpose.xlu0.b32.cont [5/16] 0.0, 128
        %1437 = vxpose.xlu0.b32.cont [6/16] 0.0, 128
        %1438 = vxpose.xlu0.b32.cont [7/16] 0.0, 128
        %1439 = vxpose.xlu0.b32.cont [8/16] 0.0, 128
        %1440 = vxpose.xlu0.b32.cont [9/16] 0.0, 128
        %1441 = vxpose.xlu0.b32.cont [10/16] 0.0, 128
        %1442 = vxpose.xlu0.b32.cont [11/16] 0.0, 128
        %1443 = vxpose.xlu0.b32.cont [12/16] 0.0, 128
        %1444 = vxpose.xlu0.b32.cont [13/16] 0.0, 128
        %1445 = vxpose.xlu0.b32.cont [14/16] 0.0, 128
        %1446 = vxpose.xlu0.b32.cont [15/16] 0.0, 128
        %1447 = vxpose.xlu0.b32.end [16/16] 0.0, 128
        %v1448 = vpop.trf.xlu0
        %v1449 = vpop.trf.xlu0
        %v1450 = vpop.trf.xlu0
        %v1451 = vpop.trf.xlu0
        %v1452 = vpop.trf.xlu0
        %v1453 = vpop.trf.xlu0
        %v1454 = vpop.trf.xlu0
        %v1455 = vpop.trf.xlu0
        %v1456 = vpop.trf.xlu0
        %v1457 = vpop.trf.xlu0
        %v1458 = vpop.trf.xlu0
        %v1459 = vpop.trf.xlu0
        %v1460 = vpop.trf.xlu0
        %v1461 = vpop.trf.xlu0
        %v1462 = vpop.trf.xlu0
        %v1463 = vpop.trf.xlu0
        %1464 = vxpose.xlu0.b32.start [1/16] %v1429, 128
        %1465 = vxpose.xlu0.b32.cont [2/16] 0.0, 128
        %1466 = vxpose.xlu0.b32.cont [3/16] 0.0, 128
        %1467 = vxpose.xlu0.b32.cont [4/16] 0.0, 128
        %1468 = vxpose.xlu0.b32.cont [5/16] 0.0, 128
        %1469 = vxpose.xlu0.b32.cont [6/16] 0.0, 128
        %1470 = vxpose.xlu0.b32.cont [7/16] 0.0, 128
        %1471 = vxpose.xlu0.b32.cont [8/16] 0.0, 128
        %1472 = vxpose.xlu0.b32.cont [9/16] 0.0, 128
        %1473 = vxpose.xlu0.b32.cont [10/16] 0.0, 128
        %1474 = vxpose.xlu0.b32.cont [11/16] 0.0, 128
        %1475 = vxpose.xlu0.b32.cont [12/16] 0.0, 128
        %1476 = vxpose.xlu0.b32.cont [13/16] 0.0, 128
        %1477 = vxpose.xlu0.b32.cont [14/16] 0.0, 128
        %1478 = vxpose.xlu0.b32.cont [15/16] 0.0, 128
        %1479 = vxpose.xlu0.b32.end [16/16] 0.0, 128
        %v1480 = vpop.trf.xlu0
        %v1481 = vpop.trf.xlu0
        %v1482 = vpop.trf.xlu0
        %v1483 = vpop.trf.xlu0
        %v1484 = vpop.trf.xlu0
        %v1485 = vpop.trf.xlu0
        %v1486 = vpop.trf.xlu0
        %v1487 = vpop.trf.xlu0
        %v1488 = vpop.trf.xlu0
        %v1489 = vpop.trf.xlu0
        %v1490 = vpop.trf.xlu0
        %v1491 = vpop.trf.xlu0
        %v1492 = vpop.trf.xlu0
        %v1493 = vpop.trf.xlu0
        %v1494 = vpop.trf.xlu0
        %v1495 = vpop.trf.xlu0
        %1496 = vxpose.xlu0.b32.start [1/16] %v1430, 128
        %1497 = vxpose.xlu0.b32.cont [2/16] 0.0, 128
        %1498 = vxpose.xlu0.b32.cont [3/16] 0.0, 128
        %1499 = vxpose.xlu0.b32.cont [4/16] 0.0, 128
        %1500 = vxpose.xlu0.b32.cont [5/16] 0.0, 128
        %1501 = vxpose.xlu0.b32.cont [6/16] 0.0, 128
        %1502 = vxpose.xlu0.b32.cont [7/16] 0.0, 128
        %1503 = vxpose.xlu0.b32.cont [8/16] 0.0, 128
        %1504 = vxpose.xlu0.b32.cont [9/16] 0.0, 128
        %1505 = vxpose.xlu0.b32.cont [10/16] 0.0, 128
        %1506 = vxpose.xlu0.b32.cont [11/16] 0.0, 128
        %1507 = vxpose.xlu0.b32.cont [12/16] 0.0, 128
        %1508 = vxpose.xlu0.b32.cont [13/16] 0.0, 128
        %1509 = vxpose.xlu0.b32.cont [14/16] 0.0, 128
        %1510 = vxpose.xlu0.b32.cont [15/16] 0.0, 128
        %1511 = vxpose.xlu0.b32.end [16/16] 0.0, 128
        %v1512 = vpop.trf.xlu0
        %v1513 = vpop.trf.xlu0
        %v1514 = vpop.trf.xlu0
        %v1515 = vpop.trf.xlu0
        %v1516 = vpop.trf.xlu0
        %v1517 = vpop.trf.xlu0
        %v1518 = vpop.trf.xlu0
        %v1519 = vpop.trf.xlu0
        %v1520 = vpop.trf.xlu0
        %v1521 = vpop.trf.xlu0
        %v1522 = vpop.trf.xlu0
        %v1523 = vpop.trf.xlu0
        %v1524 = vpop.trf.xlu0
        %v1525 = vpop.trf.xlu0
        %v1526 = vpop.trf.xlu0
        %v1527 = vpop.trf.xlu0
        %1528 = vxpose.xlu0.b32.start [1/16] %v1431, 128
        %1529 = vxpose.xlu0.b32.cont [2/16] 0.0, 128
        %1530 = vxpose.xlu0.b32.cont [3/16] 0.0, 128
        %1531 = vxpose.xlu0.b32.cont [4/16] 0.0, 128
        %1532 = vxpose.xlu0.b32.cont [5/16] 0.0, 128
        %1533 = vxpose.xlu0.b32.cont [6/16] 0.0, 128
        %1534 = vxpose.xlu0.b32.cont [7/16] 0.0, 128
        %1535 = vxpose.xlu0.b32.cont [8/16] 0.0, 128
        %1536 = vxpose.xlu0.b32.cont [9/16] 0.0, 128
        %1537 = vxpose.xlu0.b32.cont [10/16] 0.0, 128
        %1538 = vxpose.xlu0.b32.cont [11/16] 0.0, 128
        %1539 = vxpose.xlu0.b32.cont [12/16] 0.0, 128
        %1540 = vxpose.xlu0.b32.cont [13/16] 0.0, 128
        %1541 = vxpose.xlu0.b32.cont [14/16] 0.0, 128
        %1542 = vxpose.xlu0.b32.cont [15/16] 0.0, 128
        %1543 = vxpose.xlu0.b32.end [16/16] 0.0, 128
        %v1544 = vpop.trf.xlu0
        %v1545 = vpop.trf.xlu0
        %v1546 = vpop.trf.xlu0
        %v1547 = vpop.trf.xlu0
        %v1548 = vpop.trf.xlu0
        %v1549 = vpop.trf.xlu0
        %v1550 = vpop.trf.xlu0
        %v1551 = vpop.trf.xlu0
        %v1552 = vpop.trf.xlu0
        %v1553 = vpop.trf.xlu0
        %v1554 = vpop.trf.xlu0
        %v1555 = vpop.trf.xlu0
        %v1556 = vpop.trf.xlu0
        %v1557 = vpop.trf.xlu0
        %v1558 = vpop.trf.xlu0
        %v1559 = vpop.trf.xlu0
        %v1560 = vlaneseq
        %v1561 = vshrl.u32 %v1560, 7
        %v1562 = vsub.s32 0, %v1561
        %v1563 = vrot.slane %v1448, %v1562
        %v1564 = vlaneseq
        %v1565 = vshrl.u32 %v1564, 7
        %v1566 = vsub.s32 0, %v1565
        %v1567 = vrot.slane %v1480, %v1566
        %v1568 = vlaneseq
        %v1569 = vshrl.u32 %v1568, 7
        %v1570 = vsub.s32 0, %v1569
        %v1571 = vrot.slane %v1512, %v1570
        %v1572 = vlaneseq
        %v1573 = vshrl.u32 %v1572, 7
        %v1574 = vsub.s32 0, %v1573
        %v1575 = vrot.slane %v1544, %v1574
        %v1576 = vmul.f32 %v1285, %v1563
        %v1577 = vmul.f32 %v1331, %v1567
        %v1578 = vmul.f32 %v1377, %v1571
        %v1579 = vmul.f32 %v1423, %v1575
        %1580 = vxpose.xlu0.b32.start [1/16] %v1576, 128
        %1581 = vxpose.xlu0.b32.cont [2/16] %v1577, 128
        %1582 = vxpose.xlu0.b32.cont [3/16] %v1578, 128
        %1583 = vxpose.xlu0.b32.cont [4/16] %v1579, 128
        %1584 = vxpose.xlu0.b32.cont [5/16] 0.0, 128
        %1585 = vxpose.xlu0.b32.cont [6/16] 0.0, 128
        %1586 = vxpose.xlu0.b32.cont [7/16] 0.0, 128
        %1587 = vxpose.xlu0.b32.cont [8/16] 0.0, 128
        %1588 = vxpose.xlu0.b32.cont [9/16] 0.0, 128
        %1589 = vxpose.xlu0.b32.cont [10/16] 0.0, 128
        %1590 = vxpose.xlu0.b32.cont [11/16] 0.0, 128
        %1591 = vxpose.xlu0.b32.cont [12/16] 0.0, 128
        %1592 = vxpose.xlu0.b32.cont [13/16] 0.0, 128
        %1593 = vxpose.xlu0.b32.cont [14/16] 0.0, 128
        %1594 = vxpose.xlu0.b32.cont [15/16] 0.0, 128
        %1595 = vxpose.xlu0.b32.end [16/16] 0.0, 128
        %v1596 = vpop.trf.xlu0
        %v1597 = vpop.trf.xlu0
        %v1598 = vpop.trf.xlu0
        %v1599 = vpop.trf.xlu0
        %v1600 = vpop.trf.xlu0
        %v1601 = vpop.trf.xlu0
        %v1602 = vpop.trf.xlu0
        %v1603 = vpop.trf.xlu0
        %v1604 = vpop.trf.xlu0
        %v1605 = vpop.trf.xlu0
        %v1606 = vpop.trf.xlu0
        %v1607 = vpop.trf.xlu0
        %v1608 = vpop.trf.xlu0
        %v1609 = vpop.trf.xlu0
        %v1610 = vpop.trf.xlu0
        %v1611 = vpop.trf.xlu0
        %v1612 = vpack.c.bf16 %v1596, %v1596
        %vm1613 = vcmask 257024
        %1614 = vst.msk [vmem:[#allocation2] sm:$0xf] %vm1613, %v1612
        %v1615 = vld [vmem:[#allocation2] sm:$0xf]
        %v1616 = vld [vmem:[#allocation6] sm:$0xf]
        %v1617 = vld [vmem:[#allocation6 + $0x4] sm:$0xf]
        %v1618 = vld [vmem:[#allocation6 + $0x8] sm:$0xf]
        %v1619 = vld [vmem:[#allocation6 + $0xc] sm:$0xf]
        %v1620 = vld [vmem:[#allocation12] sm:$0x1]
        %v1622 = vlaneseq
        %v1623 = vshrl.u32 %v1622, 7
        %v1624 = vsub.s32 0, %v1623
        %v1625 = vrot.slane %v1620, %v1624
        %v1631 = vunpack.c.l.b16 %v1616
        %v1632 = vunpack.c.l.b16 %v1617
        %v1633 = vunpack.c.l.b16 %v1618
        %v1634 = vunpack.c.l.b16 %v1619
        %v1635 = vpack.c.b16 %v1632, %v1631
        %v1636 = vpack.c.b16 %v1634, %v1633
        %v1640 = vsel %vm691, %v1615, 0
        %1642 = vmatprep.subr.bf16.mxu0 0
        %1643 = vmatpush1.bf16.msra.mxu0 %v1635
        %1644 = vmatprep.subr.bf16.mxu0 0
        %1645 = vmatpush1.bf16.msra.mxu0 %v1636
        %1646 = vmatprep.subr.bf16.mxu0 0
        %1647 = vmatpush1.bf16.msra.mxu0 0
        %1648 = vmatprep.subr.bf16.mxu0 0
        %1649 = vmatpush1.bf16.msra.mxu0 0
        %1650 = vmatprep.subr.bf16.mxu0 0
        %1651 = vmatpush1.bf16.msra.mxu0 0
        %1652 = vmatprep.subr.bf16.mxu0 0
        %1653 = vmatpush1.bf16.msra.mxu0 0
        %1654 = vmatprep.subr.bf16.mxu0 0
        %1655 = vmatpush1.bf16.msra.mxu0 0
        %1656 = vmatprep.subr.bf16.mxu0 0
        %1657 = vmatpush1.bf16.msra.mxu0 0
        %1658 = vmatprep.subr.bf16.mxu0 0
        %1659 = vmatpush1.bf16.msra.mxu0 0
        %1660 = vmatprep.subr.bf16.mxu0 0
        %1661 = vmatpush1.bf16.msra.mxu0 0
        %1662 = vmatprep.subr.bf16.mxu0 0
        %1663 = vmatpush1.bf16.msra.mxu0 0
        %1664 = vmatprep.subr.bf16.mxu0 0
        %1665 = vmatpush1.bf16.msra.mxu0 0
        %1666 = vmatprep.subr.bf16.mxu0 0
        %1667 = vmatpush1.bf16.msra.mxu0 0
        %1668 = vmatprep.subr.bf16.mxu0 0
        %1669 = vmatpush1.bf16.msra.mxu0 0
        %1670 = vmatprep.subr.bf16.mxu0 0
        %1671 = vmatpush1.bf16.msra.mxu0 0
        %1672 = vmatprep.subr.bf16.mxu0 0
        %1673 = vmatpush1.bf16.msra.mxu0 0
        %1674 = vmatprep.mubr.bf16.mxu0 0
        %1675 = vmatmul.mubr.bf16.gmra.mrb[0].mxu0 %v1640
        %v1676 = vpop.f32.mrb[0].mxu0
        %v1677 = vadd.f32 %v1625, %v1676
        %v1678 = vpop.f32.mrb[0].mxu0
        %v1679 = vpop.f32.mrb[0].mxu0
        %v1680 = vpop.f32.mrb[0].mxu0
        %1681 = vdwg.mxu0
        %v1682 = vadd.f32 %v666, %v1677
        %v1683 = vsel %vm691, %v1682, 0.0
        %1684 = vadd.xlane.f32.xlu0 %v1683
        %v1685 = vpop.xlane.xlu0 %1684
        %v1686 = vrcp.pop 32.0
        %v1687 = vmul.f32 %v1685, %v1686
        %v1688 = vsub.f32 %v1682, %v1687
        %v1689 = vmul.f32 %v1688, %v1688
        %v1690 = vsel %vm691, %v1689, 0.0
        %1691 = vadd.xlane.f32.xlu0 %v1690
        %v1692 = vpop.xlane.xlu0 %1691
        %v1693 = vmul.f32 %v1692, %v1686
        %v1694 = vadd.f32 %v1693, 1e-05
        %v1695 = vrsqrt.pop %v1694
        %v1696 = vmul.f32 %v1688, %v1695
        %v1697 = vld [vmem:[%s10] sm:$0x1]
        %v1699 = vlaneseq
        %v1700 = vshrl.u32 %v1699, 7
        %v1701 = vsub.s32 0, %v1700
        %v1702 = vrot.slane %v1697, %v1701
        %v1704 = vmul.f32 %v1696, %v1702
        %v1705 = vld [vmem:[%s11] sm:$0x1]
        %v1707 = vlaneseq
        %v1708 = vshrl.u32 %v1707, 7
        %v1709 = vsub.s32 0, %v1708
        %v1710 = vrot.slane %v1705, %v1709
        %v1712 = vadd.f32 %v1704, %v1710
        %v1713 = vpack.c.bf16 %v1712, %v1712
        %v1714 = vld [vmem:[%s12] sm:$0xf]
        %v1715 = vld [vmem:[%s12 + $0x4] sm:$0xf]
        %v1716 = vld [vmem:[%s12 + $0x8] sm:$0xf]
        %v1717 = vld [vmem:[%s12 + $0xc] sm:$0xf]
        %v1718 = vld [vmem:[%s13] sm:$0x1]
        %v1720 = vlaneseq
        %v1721 = vshrl.u32 %v1720, 7
        %v1722 = vsub.s32 0, %v1721
        %v1723 = vrot.slane %v1718, %v1722
        %v1729 = vunpack.c.l.b16 %v1714
        %v1730 = vunpack.c.l.b16 %v1715
        %v1731 = vunpack.c.l.b16 %v1716
        %v1732 = vunpack.c.l.b16 %v1717
        %v1733 = vpack.c.b16 %v1730, %v1729
        %v1734 = vpack.c.b16 %v1732, %v1731
        %v1738 = vsel %vm691, %v1713, 0
        %1740 = vmatprep.subr.bf16.mxu0 0
        %1741 = vmatpush1.bf16.msra.mxu0 %v1733
        %1742 = vmatprep.subr.bf16.mxu0 0
        %1743 = vmatpush1.bf16.msra.mxu0 %v1734
        %1744 = vmatprep.subr.bf16.mxu0 0
        %1745 = vmatpush1.bf16.msra.mxu0 0
        %1746 = vmatprep.subr.bf16.mxu0 0
        %1747 = vmatpush1.bf16.msra.mxu0 0
        %1748 = vmatprep.subr.bf16.mxu0 0
        %1749 = vmatpush1.bf16.msra.mxu0 0
        %1750 = vmatprep.subr.bf16.mxu0 0
        %1751 = vmatpush1.bf16.msra.mxu0 0
        %1752 = vmatprep.subr.bf16.mxu0 0
        %1753 = vmatpush1.bf16.msra.mxu0 0
        %1754 = vmatprep.subr.bf16.mxu0 0
        %1755 = vmatpush1.bf16.msra.mxu0 0
        %1756 = vmatprep.subr.bf16.mxu0 0
        %1757 = vmatpush1.bf16.msra.mxu0 0
        %1758 = vmatprep.subr.bf16.mxu0 0
        %1759 = vmatpush1.bf16.msra.mxu0 0
        %1760 = vmatprep.subr.bf16.mxu0 0
        %1761 = vmatpush1.bf16.msra.mxu0 0
        %1762 = vmatprep.subr.bf16.mxu0 0
        %1763 = vmatpush1.bf16.msra.mxu0 0
        %1764 = vmatprep.subr.bf16.mxu0 0
        %1765 = vmatpush1.bf16.msra.mxu0 0
        %1766 = vmatprep.subr.bf16.mxu0 0
        %1767 = vmatpush1.bf16.msra.mxu0 0
        %1768 = vmatprep.subr.bf16.mxu0 0
        %1769 = vmatpush1.bf16.msra.mxu0 0
        %1770 = vmatprep.subr.bf16.mxu0 0
        %1771 = vmatpush1.bf16.msra.mxu0 0
        %1772 = vmatprep.mubr.bf16.mxu0 0
        %1773 = vmatmul.mubr.bf16.gmra.mrb[0].mxu0 %v1738
        %v1774 = vpop.f32.mrb[0].mxu0
        %v1775 = vadd.f32 %v1723, %v1774
        %v1776 = vpop.f32.mrb[0].mxu0
        %v1777 = vpop.f32.mrb[0].mxu0
        %v1778 = vpop.f32.mrb[0].mxu0
        %1779 = vdwg.mxu0
        %v1780 = vmax.f32 %v1775, 0.0
        %v1781 = vpack.c.bf16 %v1780, %v1780
        %v1782 = vld [vmem:[%s14] sm:$0xf]
        %v1783 = vld [vmem:[%s14 + $0x4] sm:$0xf]
        %v1784 = vld [vmem:[%s14 + $0x8] sm:$0xf]
        %v1785 = vld [vmem:[%s14 + $0xc] sm:$0xf]
        %v1786 = vld [vmem:[%s14 + $0x10] sm:$0xf]
        %v1787 = vld [vmem:[%s14 + $0x14] sm:$0xf]
        %v1788 = vld [vmem:[%s14 + $0x18] sm:$0xf]
        %v1789 = vld [vmem:[%s14 + $0x1c] sm:$0xf]
        %v1790 = vld [vmem:[%s15] sm:$0x1]
        %v1792 = vlaneseq
        %v1793 = vshrl.u32 %v1792, 7
        %v1794 = vsub.s32 0, %v1793
        %v1795 = vrot.slane %v1790, %v1794
        %v1805 = vunpack.c.l.b16 %v1782
        %v1806 = vunpack.c.l.b16 %v1783
        %v1807 = vunpack.c.l.b16 %v1784
        %v1808 = vunpack.c.l.b16 %v1785
        %v1809 = vunpack.c.l.b16 %v1786
        %v1810 = vunpack.c.l.b16 %v1787
        %v1811 = vunpack.c.l.b16 %v1788
        %v1812 = vunpack.c.l.b16 %v1789
        %v1813 = vpack.c.b16 %v1806, %v1805
        %v1814 = vpack.c.b16 %v1808, %v1807
        %v1815 = vpack.c.b16 %v1810, %v1809
        %v1816 = vpack.c.b16 %v1812, %v1811
        %vm1821 = vcmask 523264
        %v1823 = vsel %vm1821, %v1781, 0
        %1825 = vmatprep.subr.bf16.mxu0 0
        %1826 = vmatpush1.bf16.msra.mxu0 %v1813
        %1827 = vmatprep.subr.bf16.mxu0 0
        %1828 = vmatpush1.bf16.msra.mxu0 %v1814
        %1829 = vmatprep.subr.bf16.mxu0 0
        %1830 = vmatpush1.bf16.msra.mxu0 %v1815
        %1831 = vmatprep.subr.bf16.mxu0 0
        %1832 = vmatpush1.bf16.msra.mxu0 %v1816
        %1833 = vmatprep.subr.bf16.mxu0 0
        %1834 = vmatpush1.bf16.msra.mxu0 0
        %1835 = vmatprep.subr.bf16.mxu0 0
        %1836 = vmatpush1.bf16.msra.mxu0 0
        %1837 = vmatprep.subr.bf16.mxu0 0
        %1838 = vmatpush1.bf16.msra.mxu0 0
        %1839 = vmatprep.subr.bf16.mxu0 0
        %1840 = vmatpush1.bf16.msra.mxu0 0
        %1841 = vmatprep.subr.bf16.mxu0 0
        %1842 = vmatpush1.bf16.msra.mxu0 0
        %1843 = vmatprep.subr.bf16.mxu0 0
        %1844 = vmatpush1.bf16.msra.mxu0 0
        %1845 = vmatprep.subr.bf16.mxu0 0
        %1846 = vmatpush1.bf16.msra.mxu0 0
        %1847 = vmatprep.subr.bf16.mxu0 0
        %1848 = vmatpush1.bf16.msra.mxu0 0
        %1849 = vmatprep.subr.bf16.mxu0 0
        %1850 = vmatpush1.bf16.msra.mxu0 0
        %1851 = vmatprep.subr.bf16.mxu0 0
        %1852 = vmatpush1.bf16.msra.mxu0 0
        %1853 = vmatprep.subr.bf16.mxu0 0
        %1854 = vmatpush1.bf16.msra.mxu0 0
        %1855 = vmatprep.subr.bf16.mxu0 0
        %1856 = vmatpush1.bf16.msra.mxu0 0
        %1857 = vmatprep.mubr.bf16.mxu0 0
        %1858 = vmatmul.mubr.bf16.gmra.mrb[0].mxu0 %v1823
        %v1859 = vpop.f32.mrb[0].mxu0
        %v1860 = vadd.f32 %v1795, %v1859
        %v1861 = vpop.f32.mrb[0].mxu0
        %v1862 = vpop.f32.mrb[0].mxu0
        %v1863 = vpop.f32.mrb[0].mxu0
        %1864 = vdwg.mxu0
        %v1865 = vadd.f32 %v1712, %v1860
        %v1866 = vsel %vm691, %v1865, 0.0
        %1867 = vadd.xlane.f32.xlu0 %v1866
        %v1868 = vpop.xlane.xlu0 %1867
        %v1869 = vmul.f32 %v1868, %v1686
        %v1870 = vsub.f32 %v1865, %v1869
        %v1871 = vmul.f32 %v1870, %v1870
        %v1872 = vsel %vm691, %v1871, 0.0
        %1873 = vadd.xlane.f32.xlu0 %v1872
        %v1874 = vpop.xlane.xlu0 %1873
        %v1875 = vmul.f32 %v1874, %v1686
        %v1876 = vadd.f32 %v1875, 1e-05
        %v1877 = vrsqrt.pop %v1876
        %v1878 = vmul.f32 %v1870, %v1877
        %v1879 = vld [vmem:[%s16] sm:$0x1]
        %v1881 = vlaneseq
        %v1882 = vshrl.u32 %v1881, 7
        %v1883 = vsub.s32 0, %v1882
        %v1884 = vrot.slane %v1879, %v1883
        %v1886 = vmul.f32 %v1878, %v1884
        %v1887 = vld [vmem:[%s17] sm:$0x1]
        %v1889 = vlaneseq
        %v1890 = vshrl.u32 %v1889, 7
        %v1891 = vsub.s32 0, %v1890
        %v1892 = vrot.slane %v1887, %v1891
        %v1894 = vadd.f32 %v1886, %v1892
        %1895 = vst.msk [vmem:[%s657] sm:$0xff] %vm691, %v1894
        %s1896 = sand.u32 %s432, 1
        %s1897 = scalar_lea.sflag [#allocation5], %s1896
        %s1898 = sand.u32 %s432, 1
        %s1899 = smul.addr %s1898, 8
        %s1900 = scalar_lea.vmem [#allocation14], %s1899
        // Predicated region
        $region117: #{tpu_custom_call.1} parent=91 // pred_check
          %p1901 = pneg %p442
        $region118: #{tpu_custom_call.1} parent=91 // pred_check_branch
          %1903 = sbr.rel (%p1901) target = $region120
        $region119: #{tpu_custom_call.1} parent=91 // pred_region
          %s1905 = ssub.s32 128, 128
          %1906 = vsyncadd %s1897, %s1905
          %s1907 = smul.addr %s36, 128
          %s1908 = scalar_lea.hbm %s18, %s1907
          %s1910 = sshll.u32 %s1900, 4
          %s1911 = int_to_ptr.vmem [resolvable:$true] %s1910
          %1913 = dma.vmem_to_hbm [thread:$0]  %s1911, 128, %s1908, %s1897
        $region120: #{tpu_custom_call.1} parent=91 // pred_fallthru
          _
      $region92: #{tpu_custom_call.1} parent=5 // pred_fallthru
        _
      %p1914 = scmp.le.s32.totalorder 2, %s31
      // Predicated region
      $region121: #{tpu_custom_call.1} parent=5 // pred_check
        %p1915 = pneg %p1914
      $region122: #{tpu_custom_call.1} parent=5 // pred_check_branch
        %1917 = sbr.rel (%p1915) target = $region124
      $region123: #{tpu_custom_call.1} parent=5 // pred_region
        %s1918 = ssub.s32 %s31, 2
        // Predicated region
        $region125: #{tpu_custom_call.1} parent=123 // pred_check
          %p1919 = pneg %p448
        $region126: #{tpu_custom_call.1} parent=123 // pred_check_branch
          %1921 = sbr.rel (%p1919) target = $region128
        $region127: #{tpu_custom_call.1} parent=123 // pred_region
          %s1922 = sand.u32 %s433, 1
          %s1923 = scalar_lea.sflag [#allocation5], %s1922
          %s1924 = sand.u32 %s433, 1
          %s1925 = smul.addr %s1924, 8
          %s1926 = scalar_lea.vmem [#allocation14], %s1925
          %1927 = dma.done %s1923, 128
        $region128: #{tpu_custom_call.1} parent=123 // pred_fallthru
          _
      $region124: #{tpu_custom_call.1} parent=5 // pred_fallthru
        _
    $region6: #{tpu_custom_call.1} parent=1 // loop_footer
      %s35 = sadd.s32 1, %s31
    $region7: #{tpu_custom_call.1} parent=1 // loop_footer_branch
      %30 = sbr.rel target = $region3
    $region8: #{tpu_custom_call.1} parent=1 // loop_exit
      _
    %1928 = vsyncpa [#allocation4], 1
    %s1929 = scalar_lea.sflag [#allocation4], 1
    %1930 = vsyncpa %s1929, 1
    %1931 = vsyncpa [#allocation7], 1
    %1932 = vsyncpa [#allocation10], 1
    %1933 = vsyncpa [#allocation13], 1
    %1934 = vsyncpa [#allocation5], 1
    %s1935 = scalar_lea.sflag [#allocation5], 1
    %1936 = vsyncpa %s1935, 1

</llo_original>
